<compile_context>
chip_gen: v5e
topology: v5e:2x2
jax: 0.10.0
libtpu: 0.0.40
codegen_flags: <defaults>
</compile_context>

<pallas_src>
import math

import jax
import jax.numpy as jnp
import numpy as np
from jax.experimental import pallas as pl
from jax.experimental.pallas import tpu as pltpu


# ----------------------------------------------------------------------------
# Pallas kernel
# ----------------------------------------------------------------------------
def make_rnn_core_kernel(n_layers: int, hidden_dim: int, t_chunk: int,
                         b_tile: int, store_group: int, s_valid: int,
                         s_pad: int):
    L, H, T, Bt, G = n_layers, hidden_dim, t_chunk, b_tile, store_group
    n_groups = T // G
    n_extra = 2 * (L - 1)

    def kernel(x_ref, h0_ref, c0_ref, w_in_ref, b_in_ref, w_ih0p_ref,
               w_ih0a_ref, w_hh_bd_ref, b0_ref, *rest):
        extra = rest[:n_extra]
        out_ref, h_out_ref, c_out_ref, g0_scr = rest[n_extra:n_extra + 4]

        t_id = pl.program_id(1)

        # h_out/c_out blocks have a constant index map over the (arbitrary)
        # time-chunk axis -> resident in VMEM across chunks of this batch
        # tile. Seed them from (h0, c0) on the first chunk.
        @pl.when(t_id == 0)
        def _():
            h_out_ref[...] = h0_ref[...]
            c_out_ref[...] = c0_ref[...]

        # ---- batched input-to-hidden path: three big bf16 MXU matmuls per
        # chunk (f32 accumulation), result parked in a VMEM scratch.
        x = x_ref[...]                                        # [T*Bt, Din] bf16
        proj = jnp.maximum(
            jnp.dot(x, w_in_ref[...], preferred_element_type=jnp.float32)
            + b_in_ref[...], 0.0)                             # [T*Bt, P] f32
        g0 = jnp.dot(proj.astype(jnp.bfloat16), w_ih0p_ref[...],
                     preferred_element_type=jnp.float32)
        g0 = g0 + jnp.dot(x, w_ih0a_ref[...],
                          preferred_element_type=jnp.float32)
        g0_scr[...] = g0 + b0_ref[...]                        # [T*Bt, 4H] f32

        # ---- weights hoisted once per chunk (bf16 halves vreg pressure).
        w_hh_bd = w_hh_bd_ref[...]                            # [L*H, L*4H]
        w_ih = [None] + [extra[2 * i][...] for i in range(L - 1)]
        # hoist per-layer bias broadcasts out of the loop (no CSE of
        # broadcast_in_dim inside unrolled iterations).
        b_full = [None] + [jnp.broadcast_to(extra[2 * i + 1][...],
                                            (Bt, 4 * H))
                           for i in range(L - 1)]

        def lstm_cell(gates, c_prev):
            # gate order (wrapper-permuted): i, f, o, g -> only 3H sigmoid
            # lanes + H tanh lanes of EUP work per layer per step.
            sg = jax.nn.sigmoid(gates[:, :3 * H])
            i_g = sg[:, 0 * H:1 * H]
            f_g = sg[:, 1 * H:2 * H]
            o_g = sg[:, 2 * H:3 * H]
            g_g = jnp.tanh(gates[:, 3 * H:])
            c_new = f_g * c_prev + i_g * g_g
            h_new = o_g * jnp.tanh(c_new)
            return h_new, c_new

        def group_step(grp, carry):
            hs, cs = carry                              # tuples of [Bt, H] f32
            outs = []
            for j in range(G):
                t = grp * G + j
                # One recurrent matmul for ALL layers (block-diagonal W_hh):
                # removes L-1 MXU latencies from the per-step critical path.
                h_cat = jnp.concatenate(hs, axis=-1).astype(jnp.bfloat16)
                g_hh = jnp.dot(h_cat, w_hh_bd,
                               preferred_element_type=jnp.float32)  # [Bt,L*4H]
                row = pl.multiple_of(t * Bt, Bt)
                g0_t = g0_scr[pl.ds(row, Bt), :]
                new_hs, new_cs = [], []
                for l in range(L):
                    gates = g_hh[:, l * 4 * H:(l + 1) * 4 * H]
                    if l == 0:
                        gates = gates + g0_t
                    else:
                        gates = (gates
                                 + jnp.dot(new_hs[l - 1].astype(jnp.bfloat16),
                                           w_ih[l],
                                           preferred_element_type=jnp.float32)
                                 + b_full[l])
                    h_new, c_new = lstm_cell(gates, cs[l])
                    if s_pad != s_valid:
                        # zero-padded tail timesteps must not move the state
                        valid = (t_id * T + t) < s_valid
                        h_new = jnp.where(valid, h_new, hs[l])
                        c_new = jnp.where(valid, c_new, cs[l])
                    new_hs.append(h_new)
                    new_cs.append(c_new)
                hs, cs = tuple(new_hs), tuple(new_cs)
                outs.append(hs[-1])
            # lane-dense store: G steps concatenated along lanes -> one
            # unmasked [Bt, G*H] store per group instead of G masked H-lane
            # stores.
            grp_row = pl.multiple_of(grp * Bt, Bt)
            out_ref[pl.ds(grp_row, Bt), :] = jnp.concatenate(
                outs, axis=-1).astype(out_ref.dtype)
            return hs, cs

        init = (tuple(h_out_ref[l] for l in range(L)),
                tuple(c_out_ref[l] for l in range(L)))
        if n_groups <= 8:
            unroll = True
        else:
            unroll = max(d for d in (8, 4, 2, 1) if n_groups % d == 0)
        hs, cs = jax.lax.fori_loop(0, n_groups, group_step, init,
                                   unroll=unroll)

        for l in range(L):
            h_out_ref[l] = hs[l]
            c_out_ref[l] = cs[l]

    return kernel


# ----------------------------------------------------------------------------
# Wrapper helpers
# ----------------------------------------------------------------------------
def _vmem_capacity_bytes() -> int:
    try:
        info = pltpu.get_tpu_info()
        cap = getattr(info, "vmem_capacity_bytes", None)
        if cap:
            return int(cap)
    except Exception:
        pass
    return 64 * 1024 * 1024          # conservative (v7x-sized) fallback


def _tensorcores_per_chip() -> int:
    # v7x (and v4/v5p-class megacore parts) expose 2 TensorCores that a
    # "parallel" grid axis can shard across; on v5e/v6e splitting the batch
    # would just run the serial recurrence twice, so keep one tile there.
    try:
        kind = jax.devices()[0].device_kind.lower()
    except Exception:
        return 1
    if "7" in kind or "v4" in kind or "v5p" in kind:
        return 2
    return 1


def _estimate_vmem_bytes(T, Bt, Din, P, H, L):
    x_blk = 2 * T * Bt * Din * 2                 # bf16 input, double-buffered
    out_blk = 2 * T * Bt * H * 4                 # f32 output, double-buffered
    g0 = T * Bt * 4 * H * 4                      # f32 gate scratch
    temps = 3 * T * Bt * max(P, 4 * H) * 4       # proj / g0 temporaries
    w = 2 * 2 * (Din * P + P * 4 * H + Din * 4 * H
                 + (L * H) * (L * 4 * H) + (L - 1) * H * 4 * H)
    b = 2 * 4 * (P + L * 4 * H)
    hc = 4 * 2 * 4 * L * Bt * H
    return x_blk + out_blk + g0 + temps + w + b + hc


def _pick_time_chunk(S, Bt, Din, P, H, L, budget_bytes, t_mult, t_max=512):
    s_round = -(-S // t_mult) * t_mult
    T = min(max(t_mult, (t_max // t_mult) * t_mult), s_round)
    T = max(T, t_mult)
    while T > t_mult and _estimate_vmem_bytes(T, Bt, Din, P, H, L) > budget_bytes:
        T -= t_mult
    return T


# ----------------------------------------------------------------------------
# Wrapper
# ----------------------------------------------------------------------------
def rnn_core_forward(world_states, action_indices, params, hidden=None):
    """world_states: [B, S, in_size] f32; action_indices: [B, S] int32.

    Returns (rnn_out [B, S, H], (h_n [L, B, H], c_n [L, B, H]))."""
    B, S, in_size = world_states.shape
    L = len(params["lstm"])
    H = params["lstm"][0]["w_hh"].shape[0]
    A = params["emb"].shape[1]
    P = params["w_in"].shape[1]
    Din = in_size + A
    assert params["lstm"][0]["w_ih"].shape[0] == P + A

    # ---- tiling decisions ---------------------------------------------------
    Bp = ((B + 7) // 8) * 8
    n_btiles = 2 if (_tensorcores_per_chip() >= 2 and Bp % 16 == 0) else 1
    Bt = Bp // n_btiles

    if H % 128 == 0:
        t_mult = 1
    else:
        t_mult = 128 // math.gcd(H, 128)
    G = (128 // H) if (H < 128 and 128 % H == 0) else 1   # steps / dense store

    capacity = _vmem_capacity_bytes()
    T = _pick_time_chunk(S, Bt, Din, P, H, L, int(0.6 * capacity), t_mult)
    S_pad = -(-S // T) * T
    n_chunks = S_pad // T
    vmem_limit = int(0.85 * capacity)

    # ---- plain-JAX glue: embedding gather, time-major layout, padding ------
    act_emb = params["emb"][action_indices].astype(jnp.float32)      # [B,S,A]
    x = jnp.concatenate([world_states.astype(jnp.float32), act_emb], axis=-1)
    x = jnp.transpose(x, (1, 0, 2))                                   # [S,B,Din]
    x = jnp.pad(x, [(0, S_pad - S), (0, Bp - B), (0, 0)])
    # (batch-tile, time, row-in-tile)-major flattening -> every (b, t) chunk
    # is a contiguous 2-D [T*Bt, Din] block (no in-kernel reshapes needed).
    x = (x.reshape(S_pad, n_btiles, Bt, Din)
          .transpose(1, 0, 2, 3)
          .reshape(n_btiles * S_pad * Bt, Din)
          .astype(jnp.bfloat16))

    if hidden is None:
        h0 = jnp.zeros((L, Bp, H), jnp.float32)
        c0 = jnp.zeros((L, Bp, H), jnp.float32)
    else:
        h0, c0 = hidden
        h0 = jnp.pad(h0.astype(jnp.float32), [(0, 0), (0, Bp - B), (0, 0)])
        c0 = jnp.pad(c0.astype(jnp.float32), [(0, 0), (0, Bp - B), (0, 0)])

    # ---- weight preprocessing ----------------------------------------------
    def reorder(w):       # PyTorch gate order i,f,g,o -> kernel order i,f,o,g
        return jnp.concatenate([w[..., 0 * H:2 * H], w[..., 3 * H:4 * H],
                                w[..., 2 * H:3 * H]], axis=-1)

    # in_proj weight, zero-row-padded so it consumes the fused [ws|act] stream
    w_in_full = (jnp.zeros((Din, P), jnp.float32)
                 .at[:in_size].set(params["w_in"].astype(jnp.float32))
                 .astype(jnp.bfloat16))
    b_in = params["b_in"].reshape(1, P).astype(jnp.float32)

    l0 = params["lstm"][0]
    w_ih0 = reorder(l0["w_ih"].astype(jnp.float32))                  # [P+A,4H]
    w_ih0p = w_ih0[:P].astype(jnp.bfloat16)
    w_ih0a_full = (jnp.zeros((Din, 4 * H), jnp.float32)
                   .at[in_size:].set(w_ih0[P:])
                   .astype(jnp.bfloat16))
    b0 = reorder((l0["b_ih"] + l0["b_hh"]).reshape(1, 4 * H)
                 .astype(jnp.float32))

    # block-diagonal recurrent weight: one h @ W_hh matmul per step for all L
    w_hh_bd = jnp.zeros((L * H, L * 4 * H), jnp.float32)
    for l in range(L):
        w_hh_bd = w_hh_bd.at[l * H:(l + 1) * H,
                             l * 4 * H:(l + 1) * 4 * H].set(
            reorder(params["lstm"][l]["w_hh"].astype(jnp.float32)))
    w_hh_bd = w_hh_bd.astype(jnp.bfloat16)

    flat_inputs = [x, h0, c0, w_in_full, b_in, w_ih0p, w_ih0a_full,
                   w_hh_bd, b0]
    for l in range(1, L):
        lp = params["lstm"][l]
        flat_inputs += [
            reorder(lp["w_ih"].astype(jnp.float32)).astype(jnp.bfloat16),
            reorder((lp["b_ih"] + lp["b_hh"]).reshape(1, 4 * H)
                    .astype(jnp.float32)),
        ]

    # ---- pallas_call ---------------------------------------------------------
    const = lambda b, t: (0, 0)
    in_specs = [
        pl.BlockSpec((T * Bt, Din), lambda b, t: (b * n_chunks + t, 0)),   # x
        pl.BlockSpec((L, Bt, H), lambda b, t: (0, b, 0)),                  # h0
        pl.BlockSpec((L, Bt, H), lambda b, t: (0, b, 0)),                  # c0
        pl.BlockSpec((Din, P), const),                                     # w_in
        pl.BlockSpec((1, P), const),                                       # b_in
        pl.BlockSpec((P, 4 * H), const),                                   # w_ih0 (proj)
        pl.BlockSpec((Din, 4 * H), const),                                 # w_ih0 (act)
        pl.BlockSpec((L * H, L * 4 * H), const),                           # w_hh blockdiag
        pl.BlockSpec((1, 4 * H), const),                                   # b0
    ]
    for _ in range(1, L):
        in_specs += [pl.BlockSpec((H, 4 * H), const),                      # w_ih_l
                     pl.BlockSpec((1, 4 * H), const)]                      # b_l

    out_specs = (
        pl.BlockSpec(((T // G) * Bt, G * H),
                     lambda b, t: (b * n_chunks + t, 0)),                  # rnn out
        pl.BlockSpec((L, Bt, H), lambda b, t: (0, b, 0)),                  # h_n (resident)
        pl.BlockSpec((L, Bt, H), lambda b, t: (0, b, 0)),                  # c_n (resident)
    )
    out_shapes = (
        jax.ShapeDtypeStruct((n_btiles * (S_pad // G) * Bt, G * H),
                             jnp.float32),
        jax.ShapeDtypeStruct((L, Bp, H), jnp.float32),
        jax.ShapeDtypeStruct((L, Bp, H), jnp.float32),
    )

    flops = int(2 * n_btiles * S_pad * Bt * (Din * P + P * 4 * H + Din * 4 * H)
                + 2 * S_pad * Bp * ((L * H) * (L * 4 * H)
                                    + (L - 1) * H * 4 * H))
    transcendentals = int(S_pad * Bp * L * 5 * H)
    bytes_accessed = int(sum(int(np.prod(a.shape)) * a.dtype.itemsize
                             for a in flat_inputs)
                         + (n_btiles * S_pad * Bt * H + 2 * L * Bp * H) * 4)

    out2, h_out, c_out = pl.pallas_call(
        make_rnn_core_kernel(L, H, T, Bt, G, S, S_pad),
        out_shape=out_shapes,
        grid=(n_btiles, n_chunks),
        in_specs=in_specs,
        out_specs=out_specs,
        scratch_shapes=[pltpu.VMEM((T * Bt, 4 * H), jnp.float32)],
        compiler_params=pltpu.CompilerParams(
            # batch tiles are independent (sharded across TCs on 2-core
            # chips); the time recurrence is strictly serial.
            dimension_semantics=("parallel", "arbitrary"),
            vmem_limit_bytes=vmem_limit),
        cost_estimate=pl.CostEstimate(flops=flops,
                                      transcendentals=transcendentals,
                                      bytes_accessed=bytes_accessed),
    )(*flat_inputs)

    rnn_out = (out2.reshape(n_btiles, S_pad // G, Bt, G, H)
                    .transpose(0, 2, 1, 3, 4)
                    .reshape(Bp, S_pad, H)[:B, :S, :])
    return rnn_out, (h_out[:, :B, :], c_out[:, :B, :])


# ----------------------------------------------------------------------------
# Pure-JAX reference (for correctness check)
# ----------------------------------------------------------------------------
def rnn_core_reference(world_states, action_indices, params, hidden=None):
    B, S, _ = world_states.shape
    L = len(params["lstm"])
    H = params["lstm"][0]["w_hh"].shape[0]
    act_emb = params["emb"][action_indices]
    proj = jax.nn.relu(
        jnp.einsum("bsi,ip->bsp", world_states, params["w_in"],
                   precision=jax.lax.Precision.HIGHEST) + params["b_in"])
    x = jnp.concatenate([proj, act_emb], axis=-1)                  # [B,S,inner]
    if hidden is None:
        h = jnp.zeros((L, B, H), jnp.float32)
        c = jnp.zeros((L, B, H), jnp.float32)
    else:
        h, c = hidden
    outs = []
    for t in range(S):
        inp = x[:, t, :]
        new_h, new_c = [], []
        for l in range(L):
            lp = params["lstm"][l]
            gates = (inp @ lp["w_ih"] + h[l] @ lp["w_hh"]
                     + lp["b_ih"] + lp["b_hh"])
            i_g = jax.nn.sigmoid(gates[:, 0:H])
            f_g = jax.nn.sigmoid(gates[:, H:2 * H])
            g_g = jnp.tanh(gates[:, 2 * H:3 * H])
            o_g = jax.nn.sigmoid(gates[:, 3 * H:4 * H])
            c_l = f_g * c[l] + i_g * g_g
            h_l = o_g * jnp.tanh(c_l)
            new_h.append(h_l)
            new_c.append(c_l)
            inp = h_l
        h = jnp.stack(new_h)
        c = jnp.stack(new_c)
        outs.append(inp)
    return jnp.stack(outs, axis=1), (h, c)


# ----------------------------------------------------------------------------
# Deterministic parameter init (synthetic; mirrors module __init__ shapes)
# ----------------------------------------------------------------------------
def init_params(key, in_size, num_actions, action_dim, inner_dim, hidden_dim,
                n_lstm_layers):
    assert inner_dim >= in_size + action_dim
    proj_dim = inner_dim - action_dim
    keys = jax.random.split(key, 4 + 4 * n_lstm_layers)

    params = {
        "emb": jax.random.normal(keys[0], (num_actions, action_dim),
                                 jnp.float32),
        # stored pre-transposed: [in_size, proj_dim]
        "w_in": (jax.random.normal(keys[1], (in_size, proj_dim), jnp.float32)
                 * (1.0 / np.sqrt(in_size))),
        "b_in": (jax.random.uniform(keys[2], (proj_dim,), jnp.float32,
                                    -0.005, 0.005)),
        "lstm": [],
    }
    for l in range(n_lstm_layers):
        d_in = inner_dim if l == 0 else hidden_dim
        k = keys[4 + 4 * l: 8 + 4 * l]
        params["lstm"].append({
            "w_ih": (jax.random.normal(k[0], (d_in, 4 * hidden_dim),
                                       jnp.float32) * (1.0 / np.sqrt(d_in))),
            "w_hh": (jax.random.normal(k[1], (hidden_dim, 4 * hidden_dim),
                                       jnp.float32)
                     * (1.0 / np.sqrt(hidden_dim))),
            "b_ih": jax.random.uniform(k[2], (4 * hidden_dim,), jnp.float32,
                                       -0.005, 0.005),
            "b_hh": jax.random.uniform(k[3], (4 * hidden_dim,), jnp.float32,
                                       -0.005, 0.005),
        })
    return params


# ----------------------------------------------------------------------------
if __name__ == "__main__":
    # small shapes consistent with the module
    B, S = 2, 8
    in_size, num_actions, action_dim = 16, 10, 8
    inner_dim, hidden_dim, n_lstm_layers = 32, 32, 2

    key = jax.random.PRNGKey(0)
    k_param, k_ws, k_act = jax.random.split(key, 3)

    params = init_params(k_param, in_size, num_actions, action_dim,
                         inner_dim, hidden_dim, n_lstm_layers)
    world_states = jax.random.normal(k_ws, (B, S, in_size), jnp.float32)
    action_indices = jax.random.randint(k_act, (B, S), 0, num_actions,
                                        jnp.int32)

    rnn_out, (h_n, c_n) = rnn_core_forward(world_states, action_indices,
                                           params)
    jax.block_until_ready((rnn_out, h_n, c_n))

    ref_out, (ref_h, ref_c) = rnn_core_reference(world_states, action_indices,
                                                 params)
    # bf16 MXU operands with f32 accumulation vs HIGHEST-precision f32 ref.
    np.testing.assert_allclose(np.asarray(rnn_out), np.asarray(ref_out),
                               rtol=2e-2, atol=2e-2)
    np.testing.assert_allclose(np.asarray(h_n), np.asarray(ref_h),
                               rtol=2e-2, atol=2e-2)
    np.testing.assert_allclose(np.asarray(c_n), np.asarray(ref_c),
                               rtol=2e-2, atol=2e-2)

    assert rnn_out.shape == (B, S, hidden_dim)
    assert h_n.shape == (n_lstm_layers, B, hidden_dim)
    assert c_n.shape == (n_lstm_layers, B, hidden_dim)

    print("KERNEL_OK")
</pallas_src>

<mosaic_0001>
module attributes {stable_mosaic.version = 11 : i64} {
  func.func @kernel(%arg0: i32, %arg1: i32, %arg2: memref<64x24xbf16, #tpu.memory_space<vmem>>, %arg3: memref<2x8x32xf32, #tpu.memory_space<vmem>>, %arg4: memref<2x8x32xf32, #tpu.memory_space<vmem>>, %arg5: memref<24x24xbf16, #tpu.memory_space<vmem>>, %arg6: memref<1x24xf32, #tpu.memory_space<vmem>>, %arg7: memref<24x128xbf16, #tpu.memory_space<vmem>>, %arg8: memref<24x128xbf16, #tpu.memory_space<vmem>>, %arg9: memref<64x256xbf16, #tpu.memory_space<vmem>>, %arg10: memref<1x128xf32, #tpu.memory_space<vmem>>, %arg11: memref<32x128xbf16, #tpu.memory_space<vmem>>, %arg12: memref<1x128xf32, #tpu.memory_space<vmem>>, %arg13: memref<16x128xf32, #tpu.memory_space<vmem>>, %arg14: memref<2x8x32xf32, #tpu.memory_space<vmem>>, %arg15: memref<2x8x32xf32, #tpu.memory_space<vmem>>, %arg16: memref<64x128xf32, #tpu.memory_space<vmem>>) attributes {dimension_semantics = [#tpu.dimension_semantics<parallel>, #tpu.dimension_semantics<arbitrary>], iteration_bounds = array<i64: 1, 1>, scalar_prefetch = 0 : i64, scratch_operands = 1 : i64, tpu.core_type = #tpu.core_type<tc>, window_params = [{transform_indices = @transform_0, window_bounds = array<i64: 64, 24>}, {transform_indices = @transform_1, window_bounds = array<i64: 2, 8, 32>}, {transform_indices = @transform_2, window_bounds = array<i64: 2, 8, 32>}, {pipeline_mode = #tpu.pipeline_mode<synchronous>, transform_indices = @transform_3, window_bounds = array<i64: 24, 24>}, {pipeline_mode = #tpu.pipeline_mode<synchronous>, transform_indices = @transform_4, window_bounds = array<i64: 1, 24>}, {pipeline_mode = #tpu.pipeline_mode<synchronous>, transform_indices = @transform_5, window_bounds = array<i64: 24, 128>}, {pipeline_mode = #tpu.pipeline_mode<synchronous>, transform_indices = @transform_6, window_bounds = array<i64: 24, 128>}, {pipeline_mode = #tpu.pipeline_mode<synchronous>, transform_indices = @transform_7, window_bounds = array<i64: 64, 256>}, {pipeline_mode = #tpu.pipeline_mode<synchronous>, transform_indices = @transform_8, window_bounds = array<i64: 1, 128>}, {pipeline_mode = #tpu.pipeline_mode<synchronous>, transform_indices = @transform_9, window_bounds = array<i64: 32, 128>}, {pipeline_mode = #tpu.pipeline_mode<synchronous>, transform_indices = @transform_10, window_bounds = array<i64: 1, 128>}, {transform_indices = @transform_11, window_bounds = array<i64: 16, 128>}, {transform_indices = @transform_12, window_bounds = array<i64: 2, 8, 32>}, {transform_indices = @transform_13, window_bounds = array<i64: 2, 8, 32>}]} {
    %c0_i32 = arith.constant 0 : i32
    %0 = arith.cmpi eq, %arg1, %c0_i32 : i32
    %1 = arith.extui %0 : i1 to i32
    %c0_i32_0 = arith.constant 0 : i32
    %2 = arith.cmpi ne, %1, %c0_i32_0 : i32
    scf.if %2 {
      %c0_112 = arith.constant 0 : index
      %c0_113 = arith.constant 0 : index
      %c0_114 = arith.constant 0 : index
      %440 = vector.load %arg3[%c0_112, %c0_113, %c0_114] : memref<2x8x32xf32, #tpu.memory_space<vmem>>, vector<2x8x32xf32>
      %c0_115 = arith.constant 0 : index
      %c0_116 = arith.constant 0 : index
      %c0_117 = arith.constant 0 : index
      %441 = vector.load %arg14[%c0_115, %c0_116, %c0_117] : memref<2x8x32xf32, #tpu.memory_space<vmem>>, vector<2x8x32xf32>
      tpu.vector_store %arg14[%c0_115, %c0_116, %c0_117], %440 {strides = array<i32>} : memref<2x8x32xf32, #tpu.memory_space<vmem>>, vector<2x8x32xf32>,
      %c0_118 = arith.constant 0 : index
      %c0_119 = arith.constant 0 : index
      %c0_120 = arith.constant 0 : index
      %442 = vector.load %arg4[%c0_118, %c0_119, %c0_120] : memref<2x8x32xf32, #tpu.memory_space<vmem>>, vector<2x8x32xf32>
      %c0_121 = arith.constant 0 : index
      %c0_122 = arith.constant 0 : index
      %c0_123 = arith.constant 0 : index
      %443 = vector.load %arg15[%c0_121, %c0_122, %c0_123] : memref<2x8x32xf32, #tpu.memory_space<vmem>>, vector<2x8x32xf32>
      tpu.vector_store %arg15[%c0_121, %c0_122, %c0_123], %442 {strides = array<i32>} : memref<2x8x32xf32, #tpu.memory_space<vmem>>, vector<2x8x32xf32>,
    } else {
    }
    %c0 = arith.constant 0 : index
    %c0_1 = arith.constant 0 : index
    %3 = vector.load %arg2[%c0, %c0_1] : memref<64x24xbf16, #tpu.memory_space<vmem>>, vector<64x24xbf16>
    %c0_2 = arith.constant 0 : index
    %c0_3 = arith.constant 0 : index
    %4 = vector.load %arg5[%c0_2, %c0_3] : memref<24x24xbf16, #tpu.memory_space<vmem>>, vector<24x24xbf16>
    %cst = arith.constant dense<0.000000e+00> : vector<64x24xf32>
    %5 = tpu.matmul %3, %4, %cst {dimension_numbers = #tpu.dot_dimension_numbers<[1], [0], [0], [1], [0, 0, 1, 1], [], []>} : vector<64x24xbf16>, vector<24x24xbf16>, vector<64x24xf32> -> vector<64x24xf32>
    %c0_4 = arith.constant 0 : index
    %c0_5 = arith.constant 0 : index
    %6 = vector.load %arg6[%c0_4, %c0_5] : memref<1x24xf32, #tpu.memory_space<vmem>>, vector<1x24xf32>
    %7 = vector.broadcast %6 : vector<1x24xf32> to vector<64x24xf32>
    %8 = arith.addf %5, %7 : vector<64x24xf32>
    %cst_6 = arith.constant 0.000000e+00 : f32
    %9 = vector.broadcast %cst_6 : f32 to vector<64x24xf32>
    %10 = arith.maximumf %8, %9 : vector<64x24xf32>
    %11 = arith.truncf %10 : vector<64x24xf32> to vector<64x24xbf16>
    %c0_7 = arith.constant 0 : index
    %c0_8 = arith.constant 0 : index
    %12 = vector.load %arg7[%c0_7, %c0_8] : memref<24x128xbf16, #tpu.memory_space<vmem>>, vector<24x128xbf16>
    %cst_9 = arith.constant dense<0.000000e+00> : vector<64x128xf32>
    %13 = tpu.matmul %11, %12, %cst_9 {dimension_numbers = #tpu.dot_dimension_numbers<[1], [0], [0], [1], [0, 0, 1, 1], [], []>} : vector<64x24xbf16>, vector<24x128xbf16>, vector<64x128xf32> -> vector<64x128xf32>
    %c0_10 = arith.constant 0 : index
    %c0_11 = arith.constant 0 : index
    %14 = vector.load %arg8[%c0_10, %c0_11] : memref<24x128xbf16, #tpu.memory_space<vmem>>, vector<24x128xbf16>
    %cst_12 = arith.constant dense<0.000000e+00> : vector<64x128xf32>
    %15 = tpu.matmul %3, %14, %cst_12 {dimension_numbers = #tpu.dot_dimension_numbers<[1], [0], [0], [1], [0, 0, 1, 1], [], []>} : vector<64x24xbf16>, vector<24x128xbf16>, vector<64x128xf32> -> vector<64x128xf32>
    %16 = arith.addf %13, %15 : vector<64x128xf32>
    %c0_13 = arith.constant 0 : index
    %c0_14 = arith.constant 0 : index
    %17 = vector.load %arg10[%c0_13, %c0_14] : memref<1x128xf32, #tpu.memory_space<vmem>>, vector<1x128xf32>
    %18 = vector.broadcast %17 : vector<1x128xf32> to vector<64x128xf32>
    %19 = arith.addf %16, %18 : vector<64x128xf32>
    %c0_15 = arith.constant 0 : index
    %c0_16 = arith.constant 0 : index
    %20 = vector.load %arg16[%c0_15, %c0_16] : memref<64x128xf32, #tpu.memory_space<vmem>>, vector<64x128xf32>
    tpu.vector_store %arg16[%c0_15, %c0_16], %19 {strides = array<i32>} : memref<64x128xf32, #tpu.memory_space<vmem>>, vector<64x128xf32>,
    %c0_17 = arith.constant 0 : index
    %c0_18 = arith.constant 0 : index
    %21 = vector.load %arg9[%c0_17, %c0_18] : memref<64x256xbf16, #tpu.memory_space<vmem>>, vector<64x256xbf16>
    %c0_19 = arith.constant 0 : index
    %c0_20 = arith.constant 0 : index
    %22 = vector.load %arg11[%c0_19, %c0_20] : memref<32x128xbf16, #tpu.memory_space<vmem>>, vector<32x128xbf16>
    %c0_21 = arith.constant 0 : index
    %c0_22 = arith.constant 0 : index
    %23 = vector.load %arg12[%c0_21, %c0_22] : memref<1x128xf32, #tpu.memory_space<vmem>>, vector<1x128xf32>
    %24 = vector.shape_cast %23 : vector<1x128xf32> to vector<1x128xf32>
    %25 = vector.broadcast %24 : vector<1x128xf32> to vector<8x128xf32>
    %c0_23 = arith.constant 0 : index
    %c0_24 = arith.constant 0 : index
    %c0_25 = arith.constant 0 : index
    %26 = vector.load %arg14[%c0_23, %c0_24, %c0_25] : memref<2x8x32xf32, #tpu.memory_space<vmem>>, vector<1x8x32xf32>
    %27 = vector.shape_cast %26 : vector<1x8x32xf32> to vector<8x32xf32>
    %c1 = arith.constant 1 : index
    %c0_26 = arith.constant 0 : index
    %c0_27 = arith.constant 0 : index
    %28 = vector.load %arg14[%c1, %c0_26, %c0_27] : memref<2x8x32xf32, #tpu.memory_space<vmem>>, vector<1x8x32xf32>
    %29 = vector.shape_cast %28 : vector<1x8x32xf32> to vector<8x32xf32>
    %c0_28 = arith.constant 0 : index
    %c0_29 = arith.constant 0 : index
    %c0_30 = arith.constant 0 : index
    %30 = vector.load %arg15[%c0_28, %c0_29, %c0_30] : memref<2x8x32xf32, #tpu.memory_space<vmem>>, vector<1x8x32xf32>
    %31 = vector.shape_cast %30 : vector<1x8x32xf32> to vector<8x32xf32>
    %c1_31 = arith.constant 1 : index
    %c0_32 = arith.constant 0 : index
    %c0_33 = arith.constant 0 : index
    %32 = vector.load %arg15[%c1_31, %c0_32, %c0_33] : memref<2x8x32xf32, #tpu.memory_space<vmem>>, vector<1x8x32xf32>
    %33 = vector.shape_cast %32 : vector<1x8x32xf32> to vector<8x32xf32>
    %c0_i32_34 = arith.constant 0 : i32
    %c4_i32 = arith.constant 4 : i32
    %34 = arith.muli %c0_i32_34, %c4_i32 : i32
    %c0_i32_35 = arith.constant 0 : i32
    %35 = arith.addi %34, %c0_i32_35 : i32
    %36 = tpu.concatenate %27, %29 in 1 : vector<8x32xf32>, vector<8x32xf32> -> vector<8x64xf32>
    %37 = arith.truncf %36 : vector<8x64xf32> to vector<8x64xbf16>
    %cst_36 = arith.constant dense<0.000000e+00> : vector<8x256xf32>
    %38 = tpu.matmul %37, %21, %cst_36 {dimension_numbers = #tpu.dot_dimension_numbers<[1], [0], [0], [1], [0, 0, 1, 1], [], []>} : vector<8x64xbf16>, vector<64x256xbf16>, vector<8x256xf32> -> vector<8x256xf32>
    %c8_i32 = arith.constant 8 : i32
    %39 = arith.muli %35, %c8_i32 : i32
    %40 = tpu.assume_multiple %39, 8 : i32
    %41 = arith.index_cast %40 : i32 to index
    %c0_37 = arith.constant 0 : index
    %42 = vector.load %arg16[%41, %c0_37] : memref<64x128xf32, #tpu.memory_space<vmem>>, vector<8x128xf32>
    %43 = vector.extract_strided_slice %38 {offsets = [0, 0], sizes = [8, 128], strides = [1, 1]} : vector<8x256xf32> to vector<8x128xf32>
    %44 = arith.addf %43, %42 : vector<8x128xf32>
    %45 = vector.extract_strided_slice %44 {offsets = [0, 0], sizes = [8, 96], strides = [1, 1]} : vector<8x128xf32> to vector<8x96xf32>
    %46 = arith.negf %45 : vector<8x96xf32>
    %47 = math.exp %46 : vector<8x96xf32>
    %cst_38 = arith.constant 1.000000e+00 : f32
    %48 = vector.broadcast %cst_38 : f32 to vector<8x96xf32>
    %49 = arith.addf %48, %47 : vector<8x96xf32>
    %50 = arith.divf %48, %49 : vector<8x96xf32>
    %51 = vector.extract_strided_slice %50 {offsets = [0, 0], sizes = [8, 32], strides = [1, 1]} : vector<8x96xf32> to vector<8x32xf32>
    %52 = vector.extract_strided_slice %50 {offsets = [0, 32], sizes = [8, 32], strides = [1, 1]} : vector<8x96xf32> to vector<8x32xf32>
    %53 = vector.extract_strided_slice %50 {offsets = [0, 64], sizes = [8, 32], strides = [1, 1]} : vector<8x96xf32> to vector<8x32xf32>
    %54 = vector.extract_strided_slice %44 {offsets = [0, 96], sizes = [8, 32], strides = [1, 1]} : vector<8x128xf32> to vector<8x32xf32>
    %55 = math.tanh %54 : vector<8x32xf32>
    %56 = arith.mulf %52, %31 : vector<8x32xf32>
    %57 = arith.mulf %51, %55 : vector<8x32xf32>
    %58 = arith.addf %56, %57 : vector<8x32xf32>
    %59 = math.tanh %58 : vector<8x32xf32>
    %60 = arith.mulf %53, %59 : vector<8x32xf32>
    %61 = vector.extract_strided_slice %38 {offsets = [0, 128], sizes = [8, 128], strides = [1, 1]} : vector<8x256xf32> to vector<8x128xf32>
    %62 = arith.truncf %60 : vector<8x32xf32> to vector<8x32xbf16>
    %cst_39 = arith.constant dense<0.000000e+00> : vector<8x128xf32>
    %63 = tpu.matmul %62, %22, %cst_39 {dimension_numbers = #tpu.dot_dimension_numbers<[1], [0], [0], [1], [0, 0, 1, 1], [], []>} : vector<8x32xbf16>, vector<32x128xbf16>, vector<8x128xf32> -> vector<8x128xf32>
    %64 = arith.addf %61, %63 : vector<8x128xf32>
    %65 = arith.addf %64, %25 : vector<8x128xf32>
    %66 = vector.extract_strided_slice %65 {offsets = [0, 0], sizes = [8, 96], strides = [1, 1]} : vector<8x128xf32> to vector<8x96xf32>
    %67 = arith.negf %66 : vector<8x96xf32>
    %68 = math.exp %67 : vector<8x96xf32>
    %cst_40 = arith.constant 1.000000e+00 : f32
    %69 = vector.broadcast %cst_40 : f32 to vector<8x96xf32>
    %70 = arith.addf %69, %68 : vector<8x96xf32>
    %71 = arith.divf %69, %70 : vector<8x96xf32>
    %72 = vector.extract_strided_slice %71 {offsets = [0, 0], sizes = [8, 32], strides = [1, 1]} : vector<8x96xf32> to vector<8x32xf32>
    %73 = vector.extract_strided_slice %71 {offsets = [0, 32], sizes = [8, 32], strides = [1, 1]} : vector<8x96xf32> to vector<8x32xf32>
    %74 = vector.extract_strided_slice %71 {offsets = [0, 64], sizes = [8, 32], strides = [1, 1]} : vector<8x96xf32> to vector<8x32xf32>
    %75 = vector.extract_strided_slice %65 {offsets = [0, 96], sizes = [8, 32], strides = [1, 1]} : vector<8x128xf32> to vector<8x32xf32>
    %76 = math.tanh %75 : vector<8x32xf32>
    %77 = arith.mulf %73, %33 : vector<8x32xf32>
    %78 = arith.mulf %72, %76 : vector<8x32xf32>
    %79 = arith.addf %77, %78 : vector<8x32xf32>
    %80 = math.tanh %79 : vector<8x32xf32>
    %81 = arith.mulf %74, %80 : vector<8x32xf32>
    %c4_i32_41 = arith.constant 4 : i32
    %82 = arith.muli %c0_i32_34, %c4_i32_41 : i32
    %c1_i32 = arith.constant 1 : i32
    %83 = arith.addi %82, %c1_i32 : i32
    %84 = tpu.concatenate %60, %81 in 1 : vector<8x32xf32>, vector<8x32xf32> -> vector<8x64xf32>
    %85 = arith.truncf %84 : vector<8x64xf32> to vector<8x64xbf16>
    %cst_42 = arith.constant dense<0.000000e+00> : vector<8x256xf32>
    %86 = tpu.matmul %85, %21, %cst_42 {dimension_numbers = #tpu.dot_dimension_numbers<[1], [0], [0], [1], [0, 0, 1, 1], [], []>} : vector<8x64xbf16>, vector<64x256xbf16>, vector<8x256xf32> -> vector<8x256xf32>
    %c8_i32_43 = arith.constant 8 : i32
    %87 = arith.muli %83, %c8_i32_43 : i32
    %88 = tpu.assume_multiple %87, 8 : i32
    %89 = arith.index_cast %88 : i32 to index
    %c0_44 = arith.constant 0 : index
    %90 = vector.load %arg16[%89, %c0_44] : memref<64x128xf32, #tpu.memory_space<vmem>>, vector<8x128xf32>
    %91 = vector.extract_strided_slice %86 {offsets = [0, 0], sizes = [8, 128], strides = [1, 1]} : vector<8x256xf32> to vector<8x128xf32>
    %92 = arith.addf %91, %90 : vector<8x128xf32>
    %93 = vector.extract_strided_slice %92 {offsets = [0, 0], sizes = [8, 96], strides = [1, 1]} : vector<8x128xf32> to vector<8x96xf32>
    %94 = arith.negf %93 : vector<8x96xf32>
    %95 = math.exp %94 : vector<8x96xf32>
    %cst_45 = arith.constant 1.000000e+00 : f32
    %96 = vector.broadcast %cst_45 : f32 to vector<8x96xf32>
    %97 = arith.addf %96, %95 : vector<8x96xf32>
    %98 = arith.divf %96, %97 : vector<8x96xf32>
    %99 = vector.extract_strided_slice %98 {offsets = [0, 0], sizes = [8, 32], strides = [1, 1]} : vector<8x96xf32> to vector<8x32xf32>
    %100 = vector.extract_strided_slice %98 {offsets = [0, 32], sizes = [8, 32], strides = [1, 1]} : vector<8x96xf32> to vector<8x32xf32>
    %101 = vector.extract_strided_slice %98 {offsets = [0, 64], sizes = [8, 32], strides = [1, 1]} : vector<8x96xf32> to vector<8x32xf32>
    %102 = vector.extract_strided_slice %92 {offsets = [0, 96], sizes = [8, 32], strides = [1, 1]} : vector<8x128xf32> to vector<8x32xf32>
    %103 = math.tanh %102 : vector<8x32xf32>
    %104 = arith.mulf %100, %58 : vector<8x32xf32>
    %105 = arith.mulf %99, %103 : vector<8x32xf32>
    %106 = arith.addf %104, %105 : vector<8x32xf32>
    %107 = math.tanh %106 : vector<8x32xf32>
    %108 = arith.mulf %101, %107 : vector<8x32xf32>
    %109 = vector.extract_strided_slice %86 {offsets = [0, 128], sizes = [8, 128], strides = [1, 1]} : vector<8x256xf32> to vector<8x128xf32>
    %110 = arith.truncf %108 : vector<8x32xf32> to vector<8x32xbf16>
    %cst_46 = arith.constant dense<0.000000e+00> : vector<8x128xf32>
    %111 = tpu.matmul %110, %22, %cst_46 {dimension_numbers = #tpu.dot_dimension_numbers<[1], [0], [0], [1], [0, 0, 1, 1], [], []>} : vector<8x32xbf16>, vector<32x128xbf16>, vector<8x128xf32> -> vector<8x128xf32>
    %112 = arith.addf %109, %111 : vector<8x128xf32>
    %113 = arith.addf %112, %25 : vector<8x128xf32>
    %114 = vector.extract_strided_slice %113 {offsets = [0, 0], sizes = [8, 96], strides = [1, 1]} : vector<8x128xf32> to vector<8x96xf32>
    %115 = arith.negf %114 : vector<8x96xf32>
    %116 = math.exp %115 : vector<8x96xf32>
    %cst_47 = arith.constant 1.000000e+00 : f32
    %117 = vector.broadcast %cst_47 : f32 to vector<8x96xf32>
    %118 = arith.addf %117, %116 : vector<8x96xf32>
    %119 = arith.divf %117, %118 : vector<8x96xf32>
    %120 = vector.extract_strided_slice %119 {offsets = [0, 0], sizes = [8, 32], strides = [1, 1]} : vector<8x96xf32> to vector<8x32xf32>
    %121 = vector.extract_strided_slice %119 {offsets = [0, 32], sizes = [8, 32], strides = [1, 1]} : vector<8x96xf32> to vector<8x32xf32>
    %122 = vector.extract_strided_slice %119 {offsets = [0, 64], sizes = [8, 32], strides = [1, 1]} : vector<8x96xf32> to vector<8x32xf32>
    %123 = vector.extract_strided_slice %113 {offsets = [0, 96], sizes = [8, 32], strides = [1, 1]} : vector<8x128xf32> to vector<8x32xf32>
    %124 = math.tanh %123 : vector<8x32xf32>
    %125 = arith.mulf %121, %79 : vector<8x32xf32>
    %126 = arith.mulf %120, %124 : vector<8x32xf32>
    %127 = arith.addf %125, %126 : vector<8x32xf32>
    %128 = math.tanh %127 : vector<8x32xf32>
    %129 = arith.mulf %122, %128 : vector<8x32xf32>
    %c4_i32_48 = arith.constant 4 : i32
    %130 = arith.muli %c0_i32_34, %c4_i32_48 : i32
    %c2_i32 = arith.constant 2 : i32
    %131 = arith.addi %130, %c2_i32 : i32
    %132 = tpu.concatenate %108, %129 in 1 : vector<8x32xf32>, vector<8x32xf32> -> vector<8x64xf32>
    %133 = arith.truncf %132 : vector<8x64xf32> to vector<8x64xbf16>
    %cst_49 = arith.constant dense<0.000000e+00> : vector<8x256xf32>
    %134 = tpu.matmul %133, %21, %cst_49 {dimension_numbers = #tpu.dot_dimension_numbers<[1], [0], [0], [1], [0, 0, 1, 1], [], []>} : vector<8x64xbf16>, vector<64x256xbf16>, vector<8x256xf32> -> vector<8x256xf32>
    %c8_i32_50 = arith.constant 8 : i32
    %135 = arith.muli %131, %c8_i32_50 : i32
    %136 = tpu.assume_multiple %135, 8 : i32
    %137 = arith.index_cast %136 : i32 to index
    %c0_51 = arith.constant 0 : index
    %138 = vector.load %arg16[%137, %c0_51] : memref<64x128xf32, #tpu.memory_space<vmem>>, vector<8x128xf32>
    %139 = vector.extract_strided_slice %134 {offsets = [0, 0], sizes = [8, 128], strides = [1, 1]} : vector<8x256xf32> to vector<8x128xf32>
    %140 = arith.addf %139, %138 : vector<8x128xf32>
    %141 = vector.extract_strided_slice %140 {offsets = [0, 0], sizes = [8, 96], strides = [1, 1]} : vector<8x128xf32> to vector<8x96xf32>
    %142 = arith.negf %141 : vector<8x96xf32>
    %143 = math.exp %142 : vector<8x96xf32>
    %cst_52 = arith.constant 1.000000e+00 : f32
    %144 = vector.broadcast %cst_52 : f32 to vector<8x96xf32>
    %145 = arith.addf %144, %143 : vector<8x96xf32>
    %146 = arith.divf %144, %145 : vector<8x96xf32>
    %147 = vector.extract_strided_slice %146 {offsets = [0, 0], sizes = [8, 32], strides = [1, 1]} : vector<8x96xf32> to vector<8x32xf32>
    %148 = vector.extract_strided_slice %146 {offsets = [0, 32], sizes = [8, 32], strides = [1, 1]} : vector<8x96xf32> to vector<8x32xf32>
    %149 = vector.extract_strided_slice %146 {offsets = [0, 64], sizes = [8, 32], strides = [1, 1]} : vector<8x96xf32> to vector<8x32xf32>
    %150 = vector.extract_strided_slice %140 {offsets = [0, 96], sizes = [8, 32], strides = [1, 1]} : vector<8x128xf32> to vector<8x32xf32>
    %151 = math.tanh %150 : vector<8x32xf32>
    %152 = arith.mulf %148, %106 : vector<8x32xf32>
    %153 = arith.mulf %147, %151 : vector<8x32xf32>
    %154 = arith.addf %152, %153 : vector<8x32xf32>
    %155 = math.tanh %154 : vector<8x32xf32>
    %156 = arith.mulf %149, %155 : vector<8x32xf32>
    %157 = vector.extract_strided_slice %134 {offsets = [0, 128], sizes = [8, 128], strides = [1, 1]} : vector<8x256xf32> to vector<8x128xf32>
    %158 = arith.truncf %156 : vector<8x32xf32> to vector<8x32xbf16>
    %cst_53 = arith.constant dense<0.000000e+00> : vector<8x128xf32>
    %159 = tpu.matmul %158, %22, %cst_53 {dimension_numbers = #tpu.dot_dimension_numbers<[1], [0], [0], [1], [0, 0, 1, 1], [], []>} : vector<8x32xbf16>, vector<32x128xbf16>, vector<8x128xf32> -> vector<8x128xf32>
    %160 = arith.addf %157, %159 : vector<8x128xf32>
    %161 = arith.addf %160, %25 : vector<8x128xf32>
    %162 = vector.extract_strided_slice %161 {offsets = [0, 0], sizes = [8, 96], strides = [1, 1]} : vector<8x128xf32> to vector<8x96xf32>
    %163 = arith.negf %162 : vector<8x96xf32>
    %164 = math.exp %163 : vector<8x96xf32>
    %cst_54 = arith.constant 1.000000e+00 : f32
    %165 = vector.broadcast %cst_54 : f32 to vector<8x96xf32>
    %166 = arith.addf %165, %164 : vector<8x96xf32>
    %167 = arith.divf %165, %166 : vector<8x96xf32>
    %168 = vector.extract_strided_slice %167 {offsets = [0, 0], sizes = [8, 32], strides = [1, 1]} : vector<8x96xf32> to vector<8x32xf32>
    %169 = vector.extract_strided_slice %167 {offsets = [0, 32], sizes = [8, 32], strides = [1, 1]} : vector<8x96xf32> to vector<8x32xf32>
    %170 = vector.extract_strided_slice %167 {offsets = [0, 64], sizes = [8, 32], strides = [1, 1]} : vector<8x96xf32> to vector<8x32xf32>
    %171 = vector.extract_strided_slice %161 {offsets = [0, 96], sizes = [8, 32], strides = [1, 1]} : vector<8x128xf32> to vector<8x32xf32>
    %172 = math.tanh %171 : vector<8x32xf32>
    %173 = arith.mulf %169, %127 : vector<8x32xf32>
    %174 = arith.mulf %168, %172 : vector<8x32xf32>
    %175 = arith.addf %173, %174 : vector<8x32xf32>
    %176 = math.tanh %175 : vector<8x32xf32>
    %177 = arith.mulf %170, %176 : vector<8x32xf32>
    %c4_i32_55 = arith.constant 4 : i32
    %178 = arith.muli %c0_i32_34, %c4_i32_55 : i32
    %c3_i32 = arith.constant 3 : i32
    %179 = arith.addi %178, %c3_i32 : i32
    %180 = tpu.concatenate %156, %177 in 1 : vector<8x32xf32>, vector<8x32xf32> -> vector<8x64xf32>
    %181 = arith.truncf %180 : vector<8x64xf32> to vector<8x64xbf16>
    %cst_56 = arith.constant dense<0.000000e+00> : vector<8x256xf32>
    %182 = tpu.matmul %181, %21, %cst_56 {dimension_numbers = #tpu.dot_dimension_numbers<[1], [0], [0], [1], [0, 0, 1, 1], [], []>} : vector<8x64xbf16>, vector<64x256xbf16>, vector<8x256xf32> -> vector<8x256xf32>
    %c8_i32_57 = arith.constant 8 : i32
    %183 = arith.muli %179, %c8_i32_57 : i32
    %184 = tpu.assume_multiple %183, 8 : i32
    %185 = arith.index_cast %184 : i32 to index
    %c0_58 = arith.constant 0 : index
    %186 = vector.load %arg16[%185, %c0_58] : memref<64x128xf32, #tpu.memory_space<vmem>>, vector<8x128xf32>
    %187 = vector.extract_strided_slice %182 {offsets = [0, 0], sizes = [8, 128], strides = [1, 1]} : vector<8x256xf32> to vector<8x128xf32>
    %188 = arith.addf %187, %186 : vector<8x128xf32>
    %189 = vector.extract_strided_slice %188 {offsets = [0, 0], sizes = [8, 96], strides = [1, 1]} : vector<8x128xf32> to vector<8x96xf32>
    %190 = arith.negf %189 : vector<8x96xf32>
    %191 = math.exp %190 : vector<8x96xf32>
    %cst_59 = arith.constant 1.000000e+00 : f32
    %192 = vector.broadcast %cst_59 : f32 to vector<8x96xf32>
    %193 = arith.addf %192, %191 : vector<8x96xf32>
    %194 = arith.divf %192, %193 : vector<8x96xf32>
    %195 = vector.extract_strided_slice %194 {offsets = [0, 0], sizes = [8, 32], strides = [1, 1]} : vector<8x96xf32> to vector<8x32xf32>
    %196 = vector.extract_strided_slice %194 {offsets = [0, 32], sizes = [8, 32], strides = [1, 1]} : vector<8x96xf32> to vector<8x32xf32>
    %197 = vector.extract_strided_slice %194 {offsets = [0, 64], sizes = [8, 32], strides = [1, 1]} : vector<8x96xf32> to vector<8x32xf32>
    %198 = vector.extract_strided_slice %188 {offsets = [0, 96], sizes = [8, 32], strides = [1, 1]} : vector<8x128xf32> to vector<8x32xf32>
    %199 = math.tanh %198 : vector<8x32xf32>
    %200 = arith.mulf %196, %154 : vector<8x32xf32>
    %201 = arith.mulf %195, %199 : vector<8x32xf32>
    %202 = arith.addf %200, %201 : vector<8x32xf32>
    %203 = math.tanh %202 : vector<8x32xf32>
    %204 = arith.mulf %197, %203 : vector<8x32xf32>
    %205 = vector.extract_strided_slice %182 {offsets = [0, 128], sizes = [8, 128], strides = [1, 1]} : vector<8x256xf32> to vector<8x128xf32>
    %206 = arith.truncf %204 : vector<8x32xf32> to vector<8x32xbf16>
    %cst_60 = arith.constant dense<0.000000e+00> : vector<8x128xf32>
    %207 = tpu.matmul %206, %22, %cst_60 {dimension_numbers = #tpu.dot_dimension_numbers<[1], [0], [0], [1], [0, 0, 1, 1], [], []>} : vector<8x32xbf16>, vector<32x128xbf16>, vector<8x128xf32> -> vector<8x128xf32>
    %208 = arith.addf %205, %207 : vector<8x128xf32>
    %209 = arith.addf %208, %25 : vector<8x128xf32>
    %210 = vector.extract_strided_slice %209 {offsets = [0, 0], sizes = [8, 96], strides = [1, 1]} : vector<8x128xf32> to vector<8x96xf32>
    %211 = arith.negf %210 : vector<8x96xf32>
    %212 = math.exp %211 : vector<8x96xf32>
    %cst_61 = arith.constant 1.000000e+00 : f32
    %213 = vector.broadcast %cst_61 : f32 to vector<8x96xf32>
    %214 = arith.addf %213, %212 : vector<8x96xf32>
    %215 = arith.divf %213, %214 : vector<8x96xf32>
    %216 = vector.extract_strided_slice %215 {offsets = [0, 0], sizes = [8, 32], strides = [1, 1]} : vector<8x96xf32> to vector<8x32xf32>
    %217 = vector.extract_strided_slice %215 {offsets = [0, 32], sizes = [8, 32], strides = [1, 1]} : vector<8x96xf32> to vector<8x32xf32>
    %218 = vector.extract_strided_slice %215 {offsets = [0, 64], sizes = [8, 32], strides = [1, 1]} : vector<8x96xf32> to vector<8x32xf32>
    %219 = vector.extract_strided_slice %209 {offsets = [0, 96], sizes = [8, 32], strides = [1, 1]} : vector<8x128xf32> to vector<8x32xf32>
    %220 = math.tanh %219 : vector<8x32xf32>
    %221 = arith.mulf %217, %175 : vector<8x32xf32>
    %222 = arith.mulf %216, %220 : vector<8x32xf32>
    %223 = arith.addf %221, %222 : vector<8x32xf32>
    %224 = math.tanh %223 : vector<8x32xf32>
    %225 = arith.mulf %218, %224 : vector<8x32xf32>
    %c8_i32_62 = arith.constant 8 : i32
    %226 = arith.muli %c0_i32_34, %c8_i32_62 : i32
    %227 = tpu.assume_multiple %226, 8 : i32
    %228 = tpu.concatenate %81, %129, %177, %225 in 1 : vector<8x32xf32>, vector<8x32xf32>, vector<8x32xf32>, vector<8x32xf32> -> vector<8x128xf32>
    %229 = arith.index_cast %227 : i32 to index
    %c0_63 = arith.constant 0 : index
    %230 = vector.load %arg13[%229, %c0_63] : memref<16x128xf32, #tpu.memory_space<vmem>>, vector<8x128xf32>
    tpu.vector_store %arg13[%229, %c0_63], %228 {strides = array<i32>} : memref<16x128xf32, #tpu.memory_space<vmem>>, vector<8x128xf32>,
    %c1_i32_64 = arith.constant 1 : i32
    %c4_i32_65 = arith.constant 4 : i32
    %231 = arith.muli %c1_i32_64, %c4_i32_65 : i32
    %c0_i32_66 = arith.constant 0 : i32
    %232 = arith.addi %231, %c0_i32_66 : i32
    %233 = tpu.concatenate %204, %225 in 1 : vector<8x32xf32>, vector<8x32xf32> -> vector<8x64xf32>
    %234 = arith.truncf %233 : vector<8x64xf32> to vector<8x64xbf16>
    %cst_67 = arith.constant dense<0.000000e+00> : vector<8x256xf32>
    %235 = tpu.matmul %234, %21, %cst_67 {dimension_numbers = #tpu.dot_dimension_numbers<[1], [0], [0], [1], [0, 0, 1, 1], [], []>} : vector<8x64xbf16>, vector<64x256xbf16>, vector<8x256xf32> -> vector<8x256xf32>
    %c8_i32_68 = arith.constant 8 : i32
    %236 = arith.muli %232, %c8_i32_68 : i32
    %237 = tpu.assume_multiple %236, 8 : i32
    %238 = arith.index_cast %237 : i32 to index
    %c0_69 = arith.constant 0 : index
    %239 = vector.load %arg16[%238, %c0_69] : memref<64x128xf32, #tpu.memory_space<vmem>>, vector<8x128xf32>
    %240 = vector.extract_strided_slice %235 {offsets = [0, 0], sizes = [8, 128], strides = [1, 1]} : vector<8x256xf32> to vector<8x128xf32>
    %241 = arith.addf %240, %239 : vector<8x128xf32>
    %242 = vector.extract_strided_slice %241 {offsets = [0, 0], sizes = [8, 96], strides = [1, 1]} : vector<8x128xf32> to vector<8x96xf32>
    %243 = arith.negf %242 : vector<8x96xf32>
    %244 = math.exp %243 : vector<8x96xf32>
    %cst_70 = arith.constant 1.000000e+00 : f32
    %245 = vector.broadcast %cst_70 : f32 to vector<8x96xf32>
    %246 = arith.addf %245, %244 : vector<8x96xf32>
    %247 = arith.divf %245, %246 : vector<8x96xf32>
    %248 = vector.extract_strided_slice %247 {offsets = [0, 0], sizes = [8, 32], strides = [1, 1]} : vector<8x96xf32> to vector<8x32xf32>
    %249 = vector.extract_strided_slice %247 {offsets = [0, 32], sizes = [8, 32], strides = [1, 1]} : vector<8x96xf32> to vector<8x32xf32>
    %250 = vector.extract_strided_slice %247 {offsets = [0, 64], sizes = [8, 32], strides = [1, 1]} : vector<8x96xf32> to vector<8x32xf32>
    %251 = vector.extract_strided_slice %241 {offsets = [0, 96], sizes = [8, 32], strides = [1, 1]} : vector<8x128xf32> to vector<8x32xf32>
    %252 = math.tanh %251 : vector<8x32xf32>
    %253 = arith.mulf %249, %202 : vector<8x32xf32>
    %254 = arith.mulf %248, %252 : vector<8x32xf32>
    %255 = arith.addf %253, %254 : vector<8x32xf32>
    %256 = math.tanh %255 : vector<8x32xf32>
    %257 = arith.mulf %250, %256 : vector<8x32xf32>
    %258 = vector.extract_strided_slice %235 {offsets = [0, 128], sizes = [8, 128], strides = [1, 1]} : vector<8x256xf32> to vector<8x128xf32>
    %259 = arith.truncf %257 : vector<8x32xf32> to vector<8x32xbf16>
    %cst_71 = arith.constant dense<0.000000e+00> : vector<8x128xf32>
    %260 = tpu.matmul %259, %22, %cst_71 {dimension_numbers = #tpu.dot_dimension_numbers<[1], [0], [0], [1], [0, 0, 1, 1], [], []>} : vector<8x32xbf16>, vector<32x128xbf16>, vector<8x128xf32> -> vector<8x128xf32>
    %261 = arith.addf %258, %260 : vector<8x128xf32>
    %262 = arith.addf %261, %25 : vector<8x128xf32>
    %263 = vector.extract_strided_slice %262 {offsets = [0, 0], sizes = [8, 96], strides = [1, 1]} : vector<8x128xf32> to vector<8x96xf32>
    %264 = arith.negf %263 : vector<8x96xf32>
    %265 = math.exp %264 : vector<8x96xf32>
    %cst_72 = arith.constant 1.000000e+00 : f32
    %266 = vector.broadcast %cst_72 : f32 to vector<8x96xf32>
    %267 = arith.addf %266, %265 : vector<8x96xf32>
    %268 = arith.divf %266, %267 : vector<8x96xf32>
    %269 = vector.extract_strided_slice %268 {offsets = [0, 0], sizes = [8, 32], strides = [1, 1]} : vector<8x96xf32> to vector<8x32xf32>
    %270 = vector.extract_strided_slice %268 {offsets = [0, 32], sizes = [8, 32], strides = [1, 1]} : vector<8x96xf32> to vector<8x32xf32>
    %271 = vector.extract_strided_slice %268 {offsets = [0, 64], sizes = [8, 32], strides = [1, 1]} : vector<8x96xf32> to vector<8x32xf32>
    %272 = vector.extract_strided_slice %262 {offsets = [0, 96], sizes = [8, 32], strides = [1, 1]} : vector<8x128xf32> to vector<8x32xf32>
    %273 = math.tanh %272 : vector<8x32xf32>
    %274 = arith.mulf %270, %223 : vector<8x32xf32>
    %275 = arith.mulf %269, %273 : vector<8x32xf32>
    %276 = arith.addf %274, %275 : vector<8x32xf32>
    %277 = math.tanh %276 : vector<8x32xf32>
    %278 = arith.mulf %271, %277 : vector<8x32xf32>
    %c4_i32_73 = arith.constant 4 : i32
    %279 = arith.muli %c1_i32_64, %c4_i32_73 : i32
    %c1_i32_74 = arith.constant 1 : i32
    %280 = arith.addi %279, %c1_i32_74 : i32
    %281 = tpu.concatenate %257, %278 in 1 : vector<8x32xf32>, vector<8x32xf32> -> vector<8x64xf32>
    %282 = arith.truncf %281 : vector<8x64xf32> to vector<8x64xbf16>
    %cst_75 = arith.constant dense<0.000000e+00> : vector<8x256xf32>
    %283 = tpu.matmul %282, %21, %cst_75 {dimension_numbers = #tpu.dot_dimension_numbers<[1], [0], [0], [1], [0, 0, 1, 1], [], []>} : vector<8x64xbf16>, vector<64x256xbf16>, vector<8x256xf32> -> vector<8x256xf32>
    %c8_i32_76 = arith.constant 8 : i32
    %284 = arith.muli %280, %c8_i32_76 : i32
    %285 = tpu.assume_multiple %284, 8 : i32
    %286 = arith.index_cast %285 : i32 to index
    %c0_77 = arith.constant 0 : index
    %287 = vector.load %arg16[%286, %c0_77] : memref<64x128xf32, #tpu.memory_space<vmem>>, vector<8x128xf32>
    %288 = vector.extract_strided_slice %283 {offsets = [0, 0], sizes = [8, 128], strides = [1, 1]} : vector<8x256xf32> to vector<8x128xf32>
    %289 = arith.addf %288, %287 : vector<8x128xf32>
    %290 = vector.extract_strided_slice %289 {offsets = [0, 0], sizes = [8, 96], strides = [1, 1]} : vector<8x128xf32> to vector<8x96xf32>
    %291 = arith.negf %290 : vector<8x96xf32>
    %292 = math.exp %291 : vector<8x96xf32>
    %cst_78 = arith.constant 1.000000e+00 : f32
    %293 = vector.broadcast %cst_78 : f32 to vector<8x96xf32>
    %294 = arith.addf %293, %292 : vector<8x96xf32>
    %295 = arith.divf %293, %294 : vector<8x96xf32>
    %296 = vector.extract_strided_slice %295 {offsets = [0, 0], sizes = [8, 32], strides = [1, 1]} : vector<8x96xf32> to vector<8x32xf32>
    %297 = vector.extract_strided_slice %295 {offsets = [0, 32], sizes = [8, 32], strides = [1, 1]} : vector<8x96xf32> to vector<8x32xf32>
    %298 = vector.extract_strided_slice %295 {offsets = [0, 64], sizes = [8, 32], strides = [1, 1]} : vector<8x96xf32> to vector<8x32xf32>
    %299 = vector.extract_strided_slice %289 {offsets = [0, 96], sizes = [8, 32], strides = [1, 1]} : vector<8x128xf32> to vector<8x32xf32>
    %300 = math.tanh %299 : vector<8x32xf32>
    %301 = arith.mulf %297, %255 : vector<8x32xf32>
    %302 = arith.mulf %296, %300 : vector<8x32xf32>
    %303 = arith.addf %301, %302 : vector<8x32xf32>
    %304 = math.tanh %303 : vector<8x32xf32>
    %305 = arith.mulf %298, %304 : vector<8x32xf32>
    %306 = vector.extract_strided_slice %283 {offsets = [0, 128], sizes = [8, 128], strides = [1, 1]} : vector<8x256xf32> to vector<8x128xf32>
    %307 = arith.truncf %305 : vector<8x32xf32> to vector<8x32xbf16>
    %cst_79 = arith.constant dense<0.000000e+00> : vector<8x128xf32>
    %308 = tpu.matmul %307, %22, %cst_79 {dimension_numbers = #tpu.dot_dimension_numbers<[1], [0], [0], [1], [0, 0, 1, 1], [], []>} : vector<8x32xbf16>, vector<32x128xbf16>, vector<8x128xf32> -> vector<8x128xf32>
    %309 = arith.addf %306, %308 : vector<8x128xf32>
    %310 = arith.addf %309, %25 : vector<8x128xf32>
    %311 = vector.extract_strided_slice %310 {offsets = [0, 0], sizes = [8, 96], strides = [1, 1]} : vector<8x128xf32> to vector<8x96xf32>
    %312 = arith.negf %311 : vector<8x96xf32>
    %313 = math.exp %312 : vector<8x96xf32>
    %cst_80 = arith.constant 1.000000e+00 : f32
    %314 = vector.broadcast %cst_80 : f32 to vector<8x96xf32>
    %315 = arith.addf %314, %313 : vector<8x96xf32>
    %316 = arith.divf %314, %315 : vector<8x96xf32>
    %317 = vector.extract_strided_slice %316 {offsets = [0, 0], sizes = [8, 32], strides = [1, 1]} : vector<8x96xf32> to vector<8x32xf32>
    %318 = vector.extract_strided_slice %316 {offsets = [0, 32], sizes = [8, 32], strides = [1, 1]} : vector<8x96xf32> to vector<8x32xf32>
    %319 = vector.extract_strided_slice %316 {offsets = [0, 64], sizes = [8, 32], strides = [1, 1]} : vector<8x96xf32> to vector<8x32xf32>
    %320 = vector.extract_strided_slice %310 {offsets = [0, 96], sizes = [8, 32], strides = [1, 1]} : vector<8x128xf32> to vector<8x32xf32>
    %321 = math.tanh %320 : vector<8x32xf32>
    %322 = arith.mulf %318, %276 : vector<8x32xf32>
    %323 = arith.mulf %317, %321 : vector<8x32xf32>
    %324 = arith.addf %322, %323 : vector<8x32xf32>
    %325 = math.tanh %324 : vector<8x32xf32>
    %326 = arith.mulf %319, %325 : vector<8x32xf32>
    %c4_i32_81 = arith.constant 4 : i32
    %327 = arith.muli %c1_i32_64, %c4_i32_81 : i32
    %c2_i32_82 = arith.constant 2 : i32
    %328 = arith.addi %327, %c2_i32_82 : i32
    %329 = tpu.concatenate %305, %326 in 1 : vector<8x32xf32>, vector<8x32xf32> -> vector<8x64xf32>
    %330 = arith.truncf %329 : vector<8x64xf32> to vector<8x64xbf16>
    %cst_83 = arith.constant dense<0.000000e+00> : vector<8x256xf32>
    %331 = tpu.matmul %330, %21, %cst_83 {dimension_numbers = #tpu.dot_dimension_numbers<[1], [0], [0], [1], [0, 0, 1, 1], [], []>} : vector<8x64xbf16>, vector<64x256xbf16>, vector<8x256xf32> -> vector<8x256xf32>
    %c8_i32_84 = arith.constant 8 : i32
    %332 = arith.muli %328, %c8_i32_84 : i32
    %333 = tpu.assume_multiple %332, 8 : i32
    %334 = arith.index_cast %333 : i32 to index
    %c0_85 = arith.constant 0 : index
    %335 = vector.load %arg16[%334, %c0_85] : memref<64x128xf32, #tpu.memory_space<vmem>>, vector<8x128xf32>
    %336 = vector.extract_strided_slice %331 {offsets = [0, 0], sizes = [8, 128], strides = [1, 1]} : vector<8x256xf32> to vector<8x128xf32>
    %337 = arith.addf %336, %335 : vector<8x128xf32>
    %338 = vector.extract_strided_slice %337 {offsets = [0, 0], sizes = [8, 96], strides = [1, 1]} : vector<8x128xf32> to vector<8x96xf32>
    %339 = arith.negf %338 : vector<8x96xf32>
    %340 = math.exp %339 : vector<8x96xf32>
    %cst_86 = arith.constant 1.000000e+00 : f32
    %341 = vector.broadcast %cst_86 : f32 to vector<8x96xf32>
    %342 = arith.addf %341, %340 : vector<8x96xf32>
    %343 = arith.divf %341, %342 : vector<8x96xf32>
    %344 = vector.extract_strided_slice %343 {offsets = [0, 0], sizes = [8, 32], strides = [1, 1]} : vector<8x96xf32> to vector<8x32xf32>
    %345 = vector.extract_strided_slice %343 {offsets = [0, 32], sizes = [8, 32], strides = [1, 1]} : vector<8x96xf32> to vector<8x32xf32>
    %346 = vector.extract_strided_slice %343 {offsets = [0, 64], sizes = [8, 32], strides = [1, 1]} : vector<8x96xf32> to vector<8x32xf32>
    %347 = vector.extract_strided_slice %337 {offsets = [0, 96], sizes = [8, 32], strides = [1, 1]} : vector<8x128xf32> to vector<8x32xf32>
    %348 = math.tanh %347 : vector<8x32xf32>
    %349 = arith.mulf %345, %303 : vector<8x32xf32>
    %350 = arith.mulf %344, %348 : vector<8x32xf32>
    %351 = arith.addf %349, %350 : vector<8x32xf32>
    %352 = math.tanh %351 : vector<8x32xf32>
    %353 = arith.mulf %346, %352 : vector<8x32xf32>
    %354 = vector.extract_strided_slice %331 {offsets = [0, 128], sizes = [8, 128], strides = [1, 1]} : vector<8x256xf32> to vector<8x128xf32>
    %355 = arith.truncf %353 : vector<8x32xf32> to vector<8x32xbf16>
    %cst_87 = arith.constant dense<0.000000e+00> : vector<8x128xf32>
    %356 = tpu.matmul %355, %22, %cst_87 {dimension_numbers = #tpu.dot_dimension_numbers<[1], [0], [0], [1], [0, 0, 1, 1], [], []>} : vector<8x32xbf16>, vector<32x128xbf16>, vector<8x128xf32> -> vector<8x128xf32>
    %357 = arith.addf %354, %356 : vector<8x128xf32>
    %358 = arith.addf %357, %25 : vector<8x128xf32>
    %359 = vector.extract_strided_slice %358 {offsets = [0, 0], sizes = [8, 96], strides = [1, 1]} : vector<8x128xf32> to vector<8x96xf32>
    %360 = arith.negf %359 : vector<8x96xf32>
    %361 = math.exp %360 : vector<8x96xf32>
    %cst_88 = arith.constant 1.000000e+00 : f32
    %362 = vector.broadcast %cst_88 : f32 to vector<8x96xf32>
    %363 = arith.addf %362, %361 : vector<8x96xf32>
    %364 = arith.divf %362, %363 : vector<8x96xf32>
    %365 = vector.extract_strided_slice %364 {offsets = [0, 0], sizes = [8, 32], strides = [1, 1]} : vector<8x96xf32> to vector<8x32xf32>
    %366 = vector.extract_strided_slice %364 {offsets = [0, 32], sizes = [8, 32], strides = [1, 1]} : vector<8x96xf32> to vector<8x32xf32>
    %367 = vector.extract_strided_slice %364 {offsets = [0, 64], sizes = [8, 32], strides = [1, 1]} : vector<8x96xf32> to vector<8x32xf32>
    %368 = vector.extract_strided_slice %358 {offsets = [0, 96], sizes = [8, 32], strides = [1, 1]} : vector<8x128xf32> to vector<8x32xf32>
    %369 = math.tanh %368 : vector<8x32xf32>
    %370 = arith.mulf %366, %324 : vector<8x32xf32>
    %371 = arith.mulf %365, %369 : vector<8x32xf32>
    %372 = arith.addf %370, %371 : vector<8x32xf32>
    %373 = math.tanh %372 : vector<8x32xf32>
    %374 = arith.mulf %367, %373 : vector<8x32xf32>
    %c4_i32_89 = arith.constant 4 : i32
    %375 = arith.muli %c1_i32_64, %c4_i32_89 : i32
    %c3_i32_90 = arith.constant 3 : i32
    %376 = arith.addi %375, %c3_i32_90 : i32
    %377 = tpu.concatenate %353, %374 in 1 : vector<8x32xf32>, vector<8x32xf32> -> vector<8x64xf32>
    %378 = arith.truncf %377 : vector<8x64xf32> to vector<8x64xbf16>
    %cst_91 = arith.constant dense<0.000000e+00> : vector<8x256xf32>
    %379 = tpu.matmul %378, %21, %cst_91 {dimension_numbers = #tpu.dot_dimension_numbers<[1], [0], [0], [1], [0, 0, 1, 1], [], []>} : vector<8x64xbf16>, vector<64x256xbf16>, vector<8x256xf32> -> vector<8x256xf32>
    %c8_i32_92 = arith.constant 8 : i32
    %380 = arith.muli %376, %c8_i32_92 : i32
    %381 = tpu.assume_multiple %380, 8 : i32
    %382 = arith.index_cast %381 : i32 to index
    %c0_93 = arith.constant 0 : index
    %383 = vector.load %arg16[%382, %c0_93] : memref<64x128xf32, #tpu.memory_space<vmem>>, vector<8x128xf32>
    %384 = vector.extract_strided_slice %379 {offsets = [0, 0], sizes = [8, 128], strides = [1, 1]} : vector<8x256xf32> to vector<8x128xf32>
    %385 = arith.addf %384, %383 : vector<8x128xf32>
    %386 = vector.extract_strided_slice %385 {offsets = [0, 0], sizes = [8, 96], strides = [1, 1]} : vector<8x128xf32> to vector<8x96xf32>
    %387 = arith.negf %386 : vector<8x96xf32>
    %388 = math.exp %387 : vector<8x96xf32>
    %cst_94 = arith.constant 1.000000e+00 : f32
    %389 = vector.broadcast %cst_94 : f32 to vector<8x96xf32>
    %390 = arith.addf %389, %388 : vector<8x96xf32>
    %391 = arith.divf %389, %390 : vector<8x96xf32>
    %392 = vector.extract_strided_slice %391 {offsets = [0, 0], sizes = [8, 32], strides = [1, 1]} : vector<8x96xf32> to vector<8x32xf32>
    %393 = vector.extract_strided_slice %391 {offsets = [0, 32], sizes = [8, 32], strides = [1, 1]} : vector<8x96xf32> to vector<8x32xf32>
    %394 = vector.extract_strided_slice %391 {offsets = [0, 64], sizes = [8, 32], strides = [1, 1]} : vector<8x96xf32> to vector<8x32xf32>
    %395 = vector.extract_strided_slice %385 {offsets = [0, 96], sizes = [8, 32], strides = [1, 1]} : vector<8x128xf32> to vector<8x32xf32>
    %396 = math.tanh %395 : vector<8x32xf32>
    %397 = arith.mulf %393, %351 : vector<8x32xf32>
    %398 = arith.mulf %392, %396 : vector<8x32xf32>
    %399 = arith.addf %397, %398 : vector<8x32xf32>
    %400 = math.tanh %399 : vector<8x32xf32>
    %401 = arith.mulf %394, %400 : vector<8x32xf32>
    %402 = vector.extract_strided_slice %379 {offsets = [0, 128], sizes = [8, 128], strides = [1, 1]} : vector<8x256xf32> to vector<8x128xf32>
    %403 = arith.truncf %401 : vector<8x32xf32> to vector<8x32xbf16>
    %cst_95 = arith.constant dense<0.000000e+00> : vector<8x128xf32>
    %404 = tpu.matmul %403, %22, %cst_95 {dimension_numbers = #tpu.dot_dimension_numbers<[1], [0], [0], [1], [0, 0, 1, 1], [], []>} : vector<8x32xbf16>, vector<32x128xbf16>, vector<8x128xf32> -> vector<8x128xf32>
    %405 = arith.addf %402, %404 : vector<8x128xf32>
    %406 = arith.addf %405, %25 : vector<8x128xf32>
    %407 = vector.extract_strided_slice %406 {offsets = [0, 0], sizes = [8, 96], strides = [1, 1]} : vector<8x128xf32> to vector<8x96xf32>
    %408 = arith.negf %407 : vector<8x96xf32>
    %409 = math.exp %408 : vector<8x96xf32>
    %cst_96 = arith.constant 1.000000e+00 : f32
    %410 = vector.broadcast %cst_96 : f32 to vector<8x96xf32>
    %411 = arith.addf %410, %409 : vector<8x96xf32>
    %412 = arith.divf %410, %411 : vector<8x96xf32>
    %413 = vector.extract_strided_slice %412 {offsets = [0, 0], sizes = [8, 32], strides = [1, 1]} : vector<8x96xf32> to vector<8x32xf32>
    %414 = vector.extract_strided_slice %412 {offsets = [0, 32], sizes = [8, 32], strides = [1, 1]} : vector<8x96xf32> to vector<8x32xf32>
    %415 = vector.extract_strided_slice %412 {offsets = [0, 64], sizes = [8, 32], strides = [1, 1]} : vector<8x96xf32> to vector<8x32xf32>
    %416 = vector.extract_strided_slice %406 {offsets = [0, 96], sizes = [8, 32], strides = [1, 1]} : vector<8x128xf32> to vector<8x32xf32>
    %417 = math.tanh %416 : vector<8x32xf32>
    %418 = arith.mulf %414, %372 : vector<8x32xf32>
    %419 = arith.mulf %413, %417 : vector<8x32xf32>
    %420 = arith.addf %418, %419 : vector<8x32xf32>
    %421 = math.tanh %420 : vector<8x32xf32>
    %422 = arith.mulf %415, %421 : vector<8x32xf32>
    %c8_i32_97 = arith.constant 8 : i32
    %423 = arith.muli %c1_i32_64, %c8_i32_97 : i32
    %424 = tpu.assume_multiple %423, 8 : i32
    %425 = tpu.concatenate %278, %326, %374, %422 in 1 : vector<8x32xf32>, vector<8x32xf32>, vector<8x32xf32>, vector<8x32xf32> -> vector<8x128xf32>
    %426 = arith.index_cast %424 : i32 to index
    %c0_98 = arith.constant 0 : index
    %427 = vector.load %arg13[%426, %c0_98] : memref<16x128xf32, #tpu.memory_space<vmem>>, vector<8x128xf32>
    tpu.vector_store %arg13[%426, %c0_98], %425 {strides = array<i32>} : memref<16x128xf32, #tpu.memory_space<vmem>>, vector<8x128xf32>,
    %c2_i32_99 = arith.constant 2 : i32
    %c0_100 = arith.constant 0 : index
    %c0_101 = arith.constant 0 : index
    %c0_102 = arith.constant 0 : index
    %428 = vector.load %arg14[%c0_100, %c0_101, %c0_102] : memref<2x8x32xf32, #tpu.memory_space<vmem>>, vector<1x8x32xf32>
    %429 = vector.shape_cast %428 : vector<1x8x32xf32> to vector<8x32xf32>
    %430 = vector.shape_cast %401 : vector<8x32xf32> to vector<1x8x32xf32>
    tpu.vector_store %arg14[%c0_100, %c0_101, %c0_102], %430 {strides = array<i32>} : memref<2x8x32xf32, #tpu.memory_space<vmem>>, vector<1x8x32xf32>,
    %c0_103 = arith.constant 0 : index
    %c0_104 = arith.constant 0 : index
    %c0_105 = arith.constant 0 : index
    %431 = vector.load %arg15[%c0_103, %c0_104, %c0_105] : memref<2x8x32xf32, #tpu.memory_space<vmem>>, vector<1x8x32xf32>
    %432 = vector.shape_cast %431 : vector<1x8x32xf32> to vector<8x32xf32>
    %433 = vector.shape_cast %399 : vector<8x32xf32> to vector<1x8x32xf32>
    tpu.vector_store %arg15[%c0_103, %c0_104, %c0_105], %433 {strides = array<i32>} : memref<2x8x32xf32, #tpu.memory_space<vmem>>, vector<1x8x32xf32>,
    %c1_106 = arith.constant 1 : index
    %c0_107 = arith.constant 0 : index
    %c0_108 = arith.constant 0 : index
    %434 = vector.load %arg14[%c1_106, %c0_107, %c0_108] : memref<2x8x32xf32, #tpu.memory_space<vmem>>, vector<1x8x32xf32>
    %435 = vector.shape_cast %434 : vector<1x8x32xf32> to vector<8x32xf32>
    %436 = vector.shape_cast %422 : vector<8x32xf32> to vector<1x8x32xf32>
    tpu.vector_store %arg14[%c1_106, %c0_107, %c0_108], %436 {strides = array<i32>} : memref<2x8x32xf32, #tpu.memory_space<vmem>>, vector<1x8x32xf32>,
    %c1_109 = arith.constant 1 : index
    %c0_110 = arith.constant 0 : index
    %c0_111 = arith.constant 0 : index
    %437 = vector.load %arg15[%c1_109, %c0_110, %c0_111] : memref<2x8x32xf32, #tpu.memory_space<vmem>>, vector<1x8x32xf32>
    %438 = vector.shape_cast %437 : vector<1x8x32xf32> to vector<8x32xf32>
    %439 = vector.shape_cast %420 : vector<8x32xf32> to vector<1x8x32xf32>
    tpu.vector_store %arg15[%c1_109, %c0_110, %c0_111], %439 {strides = array<i32>} : memref<2x8x32xf32, #tpu.memory_space<vmem>>, vector<1x8x32xf32>,
    return
  }
  func.func @transform_0(%arg0: i32, %arg1: i32) -> (i32, i32) {
    %c1_i32 = arith.constant 1 : i32
    %0 = arith.muli %arg0, %c1_i32 : i32
    %1 = arith.addi %0, %arg1 : i32
    %c0_i32 = arith.constant 0 : i32
    %c0_i32_0 = arith.constant 0 : i32
    return %1, %c0_i32 : i32, i32
  }
  func.func @transform_1(%arg0: i32, %arg1: i32) -> (i32, i32, i32) {
    %c0_i32 = arith.constant 0 : i32
    %c0_i32_0 = arith.constant 0 : i32
    %c0_i32_1 = arith.constant 0 : i32
    return %c0_i32, %arg0, %c0_i32_0 : i32, i32, i32
  }
  func.func @transform_2(%arg0: i32, %arg1: i32) -> (i32, i32, i32) {
    %c0_i32 = arith.constant 0 : i32
    %c0_i32_0 = arith.constant 0 : i32
    %c0_i32_1 = arith.constant 0 : i32
    return %c0_i32, %arg0, %c0_i32_0 : i32, i32, i32
  }
  func.func @transform_3(%arg0: i32, %arg1: i32) -> (i32, i32) {
    %c0_i32 = arith.constant 0 : i32
    %c0_i32_0 = arith.constant 0 : i32
    %c0_i32_1 = arith.constant 0 : i32
    return %c0_i32, %c0_i32_0 : i32, i32
  }
  func.func @transform_4(%arg0: i32, %arg1: i32) -> (i32, i32) {
    %c0_i32 = arith.constant 0 : i32
    %c0_i32_0 = arith.constant 0 : i32
    %c0_i32_1 = arith.constant 0 : i32
    return %c0_i32, %c0_i32_0 : i32, i32
  }
  func.func @transform_5(%arg0: i32, %arg1: i32) -> (i32, i32) {
    %c0_i32 = arith.constant 0 : i32
    %c0_i32_0 = arith.constant 0 : i32
    %c0_i32_1 = arith.constant 0 : i32
    return %c0_i32, %c0_i32_0 : i32, i32
  }
  func.func @transform_6(%arg0: i32, %arg1: i32) -> (i32, i32) {
    %c0_i32 = arith.constant 0 : i32
    %c0_i32_0 = arith.constant 0 : i32
    %c0_i32_1 = arith.constant 0 : i32
    return %c0_i32, %c0_i32_0 : i32, i32
  }
  func.func @transform_7(%arg0: i32, %arg1: i32) -> (i32, i32) {
    %c0_i32 = arith.constant 0 : i32
    %c0_i32_0 = arith.constant 0 : i32
    %c0_i32_1 = arith.constant 0 : i32
    return %c0_i32, %c0_i32_0 : i32, i32
  }
  func.func @transform_8(%arg0: i32, %arg1: i32) -> (i32, i32) {
    %c0_i32 = arith.constant 0 : i32
    %c0_i32_0 = arith.constant 0 : i32
    %c0_i32_1 = arith.constant 0 : i32
    return %c0_i32, %c0_i32_0 : i32, i32
  }
  func.func @transform_9(%arg0: i32, %arg1: i32) -> (i32, i32) {
    %c0_i32 = arith.constant 0 : i32
    %c0_i32_0 = arith.constant 0 : i32
    %c0_i32_1 = arith.constant 0 : i32
    return %c0_i32, %c0_i32_0 : i32, i32
  }
  func.func @transform_10(%arg0: i32, %arg1: i32) -> (i32, i32) {
    %c0_i32 = arith.constant 0 : i32
    %c0_i32_0 = arith.constant 0 : i32
    %c0_i32_1 = arith.constant 0 : i32
    return %c0_i32, %c0_i32_0 : i32, i32
  }
  func.func @transform_11(%arg0: i32, %arg1: i32) -> (i32, i32) {
    %c1_i32 = arith.constant 1 : i32
    %0 = arith.muli %arg0, %c1_i32 : i32
    %1 = arith.addi %0, %arg1 : i32
    %c0_i32 = arith.constant 0 : i32
    %c0_i32_0 = arith.constant 0 : i32
    return %1, %c0_i32 : i32, i32
  }
  func.func @transform_12(%arg0: i32, %arg1: i32) -> (i32, i32, i32) {
    %c0_i32 = arith.constant 0 : i32
    %c0_i32_0 = arith.constant 0 : i32
    %c0_i32_1 = arith.constant 0 : i32
    return %c0_i32, %arg0, %c0_i32_0 : i32, i32, i32
  }
  func.func @transform_13(%arg0: i32, %arg1: i32) -> (i32, i32, i32) {
    %c0_i32 = arith.constant 0 : i32
    %c0_i32_0 = arith.constant 0 : i32
    %c0_i32_1 = arith.constant 0 : i32
    return %c0_i32, %arg0, %c0_i32_0 : i32, i32, i32
  }
}

</mosaic_0001>

<llo_original>
// kernel: tpu_custom_call.1
$region0: #{tpu_custom_call.1}
  #allocation0 [shape = 'u32[]', space=smem, size = 0x4, offset = 0x4, fixed_abs, tag = 'smem constant byte address 0x4 - core index']
  #allocation1 [shape = 'u32[72,128]{1,0:T(1,128)}', space=vmem, size = 0x9000, scoped, tag = 'internal scratch']
  #allocation2 [shape = 'f32[64,128]{1,0:T(8,128)}', space=vmem, size = 0x8000, scoped, tag = 'scratch operand']
  %s0 = inlined_call_operand.vmem [shape: bf16[64,24], index: 0, kind: input, shape index: {}]
  %s1 = inlined_call_operand.vmem [shape: f32[2,8,32], index: 1, kind: input, shape index: {}]
  %s2 = inlined_call_operand.vmem [shape: f32[2,8,32], index: 2, kind: input, shape index: {}]
  %s3 = inlined_call_operand.hbm [shape: bf16[24,24], index: 3, kind: input, shape index: {}]
  %s4 = inlined_call_operand.hbm [shape: f32[1,24], index: 4, kind: input, shape index: {}]
  %s5 = inlined_call_operand.hbm [shape: bf16[24,128], index: 5, kind: input, shape index: {}]
  %s6 = inlined_call_operand.hbm [shape: bf16[24,128], index: 6, kind: input, shape index: {}]
  %s7 = inlined_call_operand.hbm [shape: bf16[64,256], index: 7, kind: input, shape index: {}]
  %s8 = inlined_call_operand.vmem [shape: f32[1,128], index: 8, kind: input, shape index: {}]
  %s9 = inlined_call_operand.vmem [shape: bf16[32,128], index: 9, kind: input, shape index: {}]
  %s10 = inlined_call_operand.vmem [shape: f32[1,128], index: 10, kind: input, shape index: {}]
  %s11 = inlined_call_operand.hbm [shape: f32[16,128], index: 11, kind: output, shape index: {0}]
  %s12 = inlined_call_operand.hbm [shape: f32[2,8,32], index: 12, kind: output, shape index: {1}]
  %s13 = inlined_call_operand.hbm [shape: f32[2,8,32], index: 13, kind: output, shape index: {2}]
  %14 = xla_tuple %s11, %s12, %s13
  %s15 = sld [smem:[#allocation0]]
  $region94: #{tpu_custom_call.1} parent=0
    _
  %s17 = ssub.s32 1, %s15
  %s18 = scalar_select 0, %s17, %s15
  $region1: #{tpu_custom_call.1} parent=0
    #allocation3 [shape = 'u8[6144]{0}', space=vmem, size = 0x1800, scoped, tag = 'input window, operand 3, single buffered']
    #allocation4 [shape = 's32[1]{0}', space=sflag, size = 0x4, scoped, tag = 'scoped memory for tpu_custom_call.1']
    #allocation5 [shape = 's32[1]{0}', space=sflag, size = 0x4, scoped, tag = 'scoped memory for tpu_custom_call.1']
    #allocation6 [shape = 'u8[512]{0}', space=vmem, size = 0x400, scoped, tag = 'input window, operand 4, single buffered']
    #allocation7 [shape = 's32[1]{0}', space=sflag, size = 0x4, scoped, tag = 'scoped memory for tpu_custom_call.1']
    #allocation8 [shape = 'u8[6144]{0}', space=vmem, size = 0x1800, scoped, tag = 'input window, operand 5, single buffered']
    #allocation9 [shape = 'u8[6144]{0}', space=vmem, size = 0x1800, scoped, tag = 'input window, operand 6, single buffered']
    #allocation10 [shape = 's32[1]{0}', space=sflag, size = 0x4, scoped, tag = 'scoped memory for tpu_custom_call.1']
    #allocation11 [shape = 'u8[32768]{0}', space=vmem, size = 0x8000, scoped, tag = 'input window, operand 7, single buffered']
    #allocation12 [shape = 'u8[8192]{0}', space=vmem, size = 0x2000, scoped, tag = 'output window, operand 0, single buffered']
    #allocation13 [shape = 'u8[8192]{0}', space=vmem, size = 0x2000, scoped, tag = 'output window, operand 1, single buffered']
    #allocation14 [shape = 's32[1]{0}', space=sflag, size = 0x4, scoped, tag = 'scoped memory for tpu_custom_call.1']
    #allocation15 [shape = 'u8[8192]{0}', space=vmem, size = 0x2000, scoped, tag = 'output window, operand 2, single buffered']
    %19 = vsyncpa [#allocation4], 0
    %20 = vsyncpa [#allocation7], 0
    %21 = vsyncpa [#allocation10], 0
    %22 = vsyncpa [#allocation5], 0
    %23 = vsyncpa [#allocation14], 0
    // Predicated region
    $region2: #{tpu_custom_call.1} parent=1 // pred_check
      _
    $region3: #{tpu_custom_call.1} parent=1 // pred_check_branch
      %25 = sbr.rel (0) target = $region5
    $region4: #{tpu_custom_call.1} parent=1 // pred_region
      %s26 = sadd.s32 0, 0
      %s27 = smul.u32 8, %s26
      %p28 = scmp.lt.s32.totalorder %s27, 7
      %s29 = scalar_select %p28, %s27, 7
      %s30 = smul.addr %s29, 4
      %s31 = scalar_lea.vmem %s0, %s30
      %s32 = sadd.s32 0, 0
      %s33 = smul.u32 8, %s32
    $region5: #{tpu_custom_call.1} parent=1 // pred_fallthru
      _
    // Predicated region
    $region6: #{tpu_custom_call.1} parent=1 // pred_check
      _
    $region7: #{tpu_custom_call.1} parent=1 // pred_check_branch
      %35 = sbr.rel (0) target = $region9
    $region8: #{tpu_custom_call.1} parent=1 // pred_region
      _
    $region9: #{tpu_custom_call.1} parent=1 // pred_fallthru
      _
    // Predicated region
    $region10: #{tpu_custom_call.1} parent=1 // pred_check
      _
    $region11: #{tpu_custom_call.1} parent=1 // pred_check_branch
      %37 = sbr.rel (0) target = $region13
    $region12: #{tpu_custom_call.1} parent=1 // pred_region
      _
    $region13: #{tpu_custom_call.1} parent=1 // pred_fallthru
      _
    // Predicated region
    $region14: #{tpu_custom_call.1} parent=1 // pred_check
      _
    $region15: #{tpu_custom_call.1} parent=1 // pred_check_branch
      %39 = sbr.rel (0) target = $region17
    $region16: #{tpu_custom_call.1} parent=1 // pred_region
      %41 = vsyncadd [#allocation4], 0
      %s42 = sshll.u32 %s3, 4
      %s43 = int_to_ptr.hbm [resolvable:$true] %s42
      %s44 = sshll.u32 [#allocation3], 4
      %s45 = int_to_ptr.vmem [resolvable:$true] %s44
      %50 = dma.hbm_to_vmem [thread:$0]  %s43, 192, %s45, [#allocation4], 64, 64, 4
    $region17: #{tpu_custom_call.1} parent=1 // pred_fallthru
      _
    // Predicated region
    $region18: #{tpu_custom_call.1} parent=1 // pred_check
      _
    $region19: #{tpu_custom_call.1} parent=1 // pred_check_branch
      %52 = sbr.rel (0) target = $region21
    $region20: #{tpu_custom_call.1} parent=1 // pred_region
      %54 = vsyncadd [#allocation7], 0
      %s56 = sshll.u32 %s4, 4
      %s57 = int_to_ptr.hbm [resolvable:$true] %s56
      %s58 = sshll.u32 [#allocation6], 4
      %s59 = int_to_ptr.vmem [resolvable:$true] %s58
      %61 = dma.hbm_to_vmem [thread:$0]  %s57, 16, %s59, [#allocation7]
    $region21: #{tpu_custom_call.1} parent=1 // pred_fallthru
      _
    // Predicated region
    $region22: #{tpu_custom_call.1} parent=1 // pred_check
      _
    $region23: #{tpu_custom_call.1} parent=1 // pred_check_branch
      %63 = sbr.rel (0) target = $region25
    $region24: #{tpu_custom_call.1} parent=1 // pred_region
      %65 = vsyncadd [#allocation7], 0
      %s66 = sshll.u32 %s5, 4
      %s67 = int_to_ptr.hbm [resolvable:$true] %s66
      %s68 = sshll.u32 [#allocation8], 4
      %s69 = int_to_ptr.vmem [resolvable:$true] %s68
      %74 = dma.hbm_to_vmem [thread:$0]  %s67, 192, %s69, [#allocation7], 64, 64, 4
    $region25: #{tpu_custom_call.1} parent=1 // pred_fallthru
      _
    // Predicated region
    $region26: #{tpu_custom_call.1} parent=1 // pred_check
      _
    $region27: #{tpu_custom_call.1} parent=1 // pred_check_branch
      %76 = sbr.rel (0) target = $region29
    $region28: #{tpu_custom_call.1} parent=1 // pred_region
      %78 = vsyncadd [#allocation10], 0
      %s79 = sshll.u32 %s6, 4
      %s80 = int_to_ptr.hbm [resolvable:$true] %s79
      %s81 = sshll.u32 [#allocation9], 4
      %s82 = int_to_ptr.vmem [resolvable:$true] %s81
      %87 = dma.hbm_to_vmem [thread:$0]  %s80, 192, %s82, [#allocation10], 64, 64, 4
    $region29: #{tpu_custom_call.1} parent=1 // pred_fallthru
      _
    // Predicated region
    $region30: #{tpu_custom_call.1} parent=1 // pred_check
      _
    $region31: #{tpu_custom_call.1} parent=1 // pred_check_branch
      %89 = sbr.rel (0) target = $region33
    $region32: #{tpu_custom_call.1} parent=1 // pred_region
      %91 = vsyncadd [#allocation10], 0
      %s92 = sshll.u32 %s7, 4
      %s93 = int_to_ptr.hbm [resolvable:$true] %s92
      %s94 = sshll.u32 [#allocation11], 4
      %s95 = int_to_ptr.vmem [resolvable:$true] %s94
      %100 = dma.hbm_to_vmem [thread:$0]  %s93, 1024, %s95, [#allocation10], 128, 128, 8
    $region33: #{tpu_custom_call.1} parent=1 // pred_fallthru
      _
    // Predicated region
    $region34: #{tpu_custom_call.1} parent=1 // pred_check
      _
    $region35: #{tpu_custom_call.1} parent=1 // pred_check_branch
      %102 = sbr.rel (0) target = $region37
    $region36: #{tpu_custom_call.1} parent=1 // pred_region
      _
    $region37: #{tpu_custom_call.1} parent=1 // pred_fallthru
      _
    // Predicated region
    $region38: #{tpu_custom_call.1} parent=1 // pred_check
      _
    $region39: #{tpu_custom_call.1} parent=1 // pred_check_branch
      %104 = sbr.rel (0) target = $region41
    $region40: #{tpu_custom_call.1} parent=1 // pred_region
      _
    $region41: #{tpu_custom_call.1} parent=1 // pred_fallthru
      _
    // Predicated region
    $region42: #{tpu_custom_call.1} parent=1 // pred_check
      _
    $region43: #{tpu_custom_call.1} parent=1 // pred_check_branch
      %106 = sbr.rel (0) target = $region45
    $region44: #{tpu_custom_call.1} parent=1 // pred_region
      _
    $region45: #{tpu_custom_call.1} parent=1 // pred_fallthru
      _
    // Predicated region
    $region46: #{tpu_custom_call.1} parent=1 // pred_check
      _
    $region47: #{tpu_custom_call.1} parent=1 // pred_check_branch
      %108 = sbr.rel (0) target = $region49
    $region48: #{tpu_custom_call.1} parent=1 // pred_region
      %110 = dma.done [#allocation4], 192
    $region49: #{tpu_custom_call.1} parent=1 // pred_fallthru
      _
    // Predicated region
    $region50: #{tpu_custom_call.1} parent=1 // pred_check
      _
    $region51: #{tpu_custom_call.1} parent=1 // pred_check_branch
      %112 = sbr.rel (0) target = $region53
    $region52: #{tpu_custom_call.1} parent=1 // pred_region
      %114 = dma.done [#allocation7], 16
    $region53: #{tpu_custom_call.1} parent=1 // pred_fallthru
      _
    // Predicated region
    $region54: #{tpu_custom_call.1} parent=1 // pred_check
      _
    $region55: #{tpu_custom_call.1} parent=1 // pred_check_branch
      %116 = sbr.rel (0) target = $region57
    $region56: #{tpu_custom_call.1} parent=1 // pred_region
      %118 = dma.done [#allocation7], 192
    $region57: #{tpu_custom_call.1} parent=1 // pred_fallthru
      _
    // Predicated region
    $region58: #{tpu_custom_call.1} parent=1 // pred_check
      _
    $region59: #{tpu_custom_call.1} parent=1 // pred_check_branch
      %120 = sbr.rel (0) target = $region61
    $region60: #{tpu_custom_call.1} parent=1 // pred_region
      %122 = dma.done [#allocation10], 192
    $region61: #{tpu_custom_call.1} parent=1 // pred_fallthru
      _
    // Predicated region
    $region62: #{tpu_custom_call.1} parent=1 // pred_check
      _
    $region63: #{tpu_custom_call.1} parent=1 // pred_check_branch
      %124 = sbr.rel (0) target = $region65
    $region64: #{tpu_custom_call.1} parent=1 // pred_region
      %126 = dma.done [#allocation10], 1024
    $region65: #{tpu_custom_call.1} parent=1 // pred_fallthru
      _
    %s127 = sadd.s32 0, 0
    %s128 = smul.u32 8, %s127
    %p129 = scmp.lt.s32.totalorder %s128, 7
    %s130 = scalar_select %p129, %s128, 7
    %s131 = smul.addr %s130, 4
    %s132 = scalar_lea.vmem %s0, %s131
    %s133 = sadd.s32 0, 0
    %s134 = smul.u32 8, %s133
    %p135 = scmp.lt.s32.totalorder %s134, 7
    %s136 = scalar_select %p135, %s134, 7
    %s137 = smul.addr %s136, 4
    %s138 = scalar_lea.vmem %s0, %s137
    %s139 = sadd.s32 0, 0
    %s140 = smul.u32 8, %s139
    %s141 = sadd.s32 0, 0
    %s142 = smul.u32 2, %s141
    %p144 = scmp.eq.s32.totalorder 0, 0
    // Predicated region
    $region66: #{tpu_custom_call.1} parent=1 // pred_check
      %p145 = pneg %p144
    $region67: #{tpu_custom_call.1} parent=1 // pred_check_branch
      %147 = sbr.rel (%p145) target = $region69
    $region68: #{tpu_custom_call.1} parent=1 // pred_region
      %v148 = vld [vmem:[%s1] sm:$0xff]
      %v149 = vld [vmem:[%s1 + $0x8] sm:$0xff]
      %vm150 = vcmask 261120
      %151 = vst.msk [vmem:[#allocation13] sm:$0xff] %vm150, %v148
      %152 = vst.msk [vmem:[#allocation13 + $0x8] sm:$0xff] %vm150, %v149
      %v153 = vld [vmem:[%s2] sm:$0xff]
      %v154 = vld [vmem:[%s2 + $0x8] sm:$0xff]
      %155 = vst.msk [vmem:[#allocation15] sm:$0xff] %vm150, %v153
      %156 = vst.msk [vmem:[#allocation15 + $0x8] sm:$0xff] %vm150, %v154
    $region69: #{tpu_custom_call.1} parent=1 // pred_fallthru
      _
    %v157 = vld [vmem:[%s138] sm:$0xf]
    %v158 = vld [vmem:[%s138 + $0x4] sm:$0xf]
    %v159 = vld [vmem:[%s138 + $0x8] sm:$0xf]
    %v160 = vld [vmem:[%s138 + $0xc] sm:$0xf]
    %v161 = vld [vmem:[%s138 + $0x10] sm:$0xf]
    %v162 = vld [vmem:[%s138 + $0x14] sm:$0xf]
    %v163 = vld [vmem:[%s138 + $0x18] sm:$0xf]
    %v164 = vld [vmem:[%s138 + $0x1c] sm:$0xf]
    %v165 = vld [vmem:[#allocation3] sm:$0xf]
    %v166 = vld [vmem:[#allocation3 + $0x4] sm:$0xf]
    %v167 = vld [vmem:[#allocation3 + $0x8] sm:$0xf]
    %v168 = vld [vmem:[#allocation6] sm:$0x1]
    %v170 = vperm.slane %v168, 0
    %v180 = vunpack.c.l.b16 %v157
    %v181 = vunpack.c.l.b16 %v158
    %v182 = vunpack.c.l.b16 %v159
    %v183 = vunpack.c.l.b16 %v160
    %v184 = vunpack.c.l.b16 %v161
    %v185 = vunpack.c.l.b16 %v162
    %v186 = vunpack.c.l.b16 %v163
    %v187 = vunpack.c.l.b16 %v164
    %v188 = vpack.c.b16 %v181, %v180
    %v189 = vpack.c.b16 %v183, %v182
    %v190 = vpack.c.b16 %v185, %v184
    %v191 = vpack.c.b16 %v187, %v186
    %v195 = vunpack.c.l.b16 %v165
    %v196 = vunpack.c.l.b16 %v166
    %v197 = vunpack.c.l.b16 %v167
    %v198 = vpack.c.b16 %v196, %v195
    %v199 = vpack.c.b16 %v197, %v197
    %vm201 = vcmask 195584
    %v203 = vsel %vm201, %v188, 0
    %v206 = vsel %vm201, %v189, 0
    %v209 = vsel %vm201, %v190, 0
    %v212 = vsel %vm201, %v191, 0
    %vm214 = vcmask 1043456
    %v216 = vsel %vm214, %v199, 0
    %218 = vmatpush.bf16.msra.mxu0 0
    %219 = vmatpush.bf16.msra.mxu0 0
    %220 = vmatpush.bf16.msra.mxu0 0
    %221 = vmatpush.bf16.msra.mxu0 0
    %222 = vmatpush.bf16.msra.mxu0 0
    %223 = vmatpush.bf16.msra.mxu0 0
    %224 = vmatpush.bf16.msra.mxu0 %v216
    %225 = vmatpush.bf16.msra.mxu0 %v198
    %226 = vmatmul.bf16.gmra.mxu0 %v203
    %v227 = vpop.f32.mrf.mxu0
    %v228 = vadd.f32 %v170, %v227
    %v229 = vpop.f32.mrf.mxu0
    %v230 = vadd.f32 %v170, %v229
    %231 = vmatmul.bf16.gmra.mxu0 %v206
    %v232 = vpop.f32.mrf.mxu0
    %v233 = vadd.f32 %v170, %v232
    %v234 = vpop.f32.mrf.mxu0
    %v235 = vadd.f32 %v170, %v234
    %236 = vmatmul.bf16.gmra.mxu0 %v209
    %v237 = vpop.f32.mrf.mxu0
    %v238 = vadd.f32 %v170, %v237
    %v239 = vpop.f32.mrf.mxu0
    %v240 = vadd.f32 %v170, %v239
    %241 = vmatmul.bf16.gmra.mxu0 %v212
    %v242 = vpop.f32.mrf.mxu0
    %v243 = vadd.f32 %v170, %v242
    %v244 = vpop.f32.mrf.mxu0
    %v245 = vadd.f32 %v170, %v244
    %246 = vdwg.mxu0
    %v247 = vmax.f32 %v228, 0.0
    %v248 = vmax.f32 %v230, 0.0
    %v249 = vmax.f32 %v233, 0.0
    %v250 = vmax.f32 %v235, 0.0
    %v251 = vmax.f32 %v238, 0.0
    %v252 = vmax.f32 %v240, 0.0
    %v253 = vmax.f32 %v243, 0.0
    %v254 = vmax.f32 %v245, 0.0
    %v255 = vpack.c.bf16 %v248, %v247
    %v256 = vpack.c.bf16 %v250, %v249
    %v257 = vpack.c.bf16 %v252, %v251
    %v258 = vpack.c.bf16 %v254, %v253
    %v259 = vld [vmem:[#allocation8] sm:$0xf]
    %v260 = vld [vmem:[#allocation8 + $0x4] sm:$0xf]
    %v261 = vld [vmem:[#allocation8 + $0x8] sm:$0xf]
    %v262 = vld [vmem:[#allocation9] sm:$0xf]
    %v263 = vld [vmem:[#allocation9 + $0x4] sm:$0xf]
    %v264 = vld [vmem:[#allocation9 + $0x8] sm:$0xf]
    %v268 = vunpack.c.l.b16 %v262
    %v269 = vunpack.c.l.b16 %v263
    %v270 = vunpack.c.l.b16 %v264
    %v271 = vpack.c.b16 %v269, %v268
    %v272 = vpack.c.b16 %v270, %v270
    %v275 = vsel %vm214, %v272, 0
    %277 = vmatpush.bf16.msra.mxu0 0
    %278 = vmatpush.bf16.msra.mxu0 0
    %279 = vmatpush.bf16.msra.mxu0 0
    %280 = vmatpush.bf16.msra.mxu0 0
    %281 = vmatpush.bf16.msra.mxu0 0
    %282 = vmatpush.bf16.msra.mxu0 0
    %283 = vmatpush.bf16.msra.mxu0 %v275
    %284 = vmatpush.bf16.msra.mxu0 %v271
    %285 = vmatmul.bf16.gmra.mxu0 %v203
    %v286 = vpop.f32.mrf.mxu0
    %v287 = vadd.f32 0.0, %v286
    %v288 = vpop.f32.mrf.mxu0
    %v289 = vadd.f32 0.0, %v288
    %290 = vmatmul.bf16.gmra.mxu0 %v206
    %v291 = vpop.f32.mrf.mxu0
    %v292 = vadd.f32 0.0, %v291
    %v293 = vpop.f32.mrf.mxu0
    %v294 = vadd.f32 0.0, %v293
    %295 = vmatmul.bf16.gmra.mxu0 %v209
    %v296 = vpop.f32.mrf.mxu0
    %v297 = vadd.f32 0.0, %v296
    %v298 = vpop.f32.mrf.mxu0
    %v299 = vadd.f32 0.0, %v298
    %300 = vmatmul.bf16.gmra.mxu0 %v212
    %v301 = vpop.f32.mrf.mxu0
    %v302 = vadd.f32 0.0, %v301
    %v303 = vpop.f32.mrf.mxu0
    %v304 = vadd.f32 0.0, %v303
    %305 = vdwg.mxu0
    %v309 = vunpack.c.l.b16 %v259
    %v310 = vunpack.c.l.b16 %v260
    %v311 = vunpack.c.l.b16 %v261
    %v312 = vpack.c.b16 %v310, %v309
    %v313 = vpack.c.b16 %v311, %v311
    %v316 = vsel %vm201, %v255, 0
    %v319 = vsel %vm201, %v256, 0
    %v322 = vsel %vm201, %v257, 0
    %v325 = vsel %vm201, %v258, 0
    %v328 = vsel %vm214, %v313, 0
    %330 = vmatpush.bf16.msra.mxu0 0
    %331 = vmatpush.bf16.msra.mxu0 0
    %332 = vmatpush.bf16.msra.mxu0 0
    %333 = vmatpush.bf16.msra.mxu0 0
    %334 = vmatpush.bf16.msra.mxu0 0
    %335 = vmatpush.bf16.msra.mxu0 0
    %336 = vmatpush.bf16.msra.mxu0 %v328
    %337 = vmatpush.bf16.msra.mxu0 %v312
    %338 = vmatmul.bf16.gmra.mxu0 %v316
    %v339 = vpop.f32.mrf.mxu0
    %v340 = vadd.f32 %v287, %v339
    %v341 = vpop.f32.mrf.mxu0
    %v342 = vadd.f32 %v289, %v341
    %343 = vmatmul.bf16.gmra.mxu0 %v319
    %v344 = vpop.f32.mrf.mxu0
    %v345 = vadd.f32 %v292, %v344
    %v346 = vpop.f32.mrf.mxu0
    %v347 = vadd.f32 %v294, %v346
    %348 = vmatmul.bf16.gmra.mxu0 %v322
    %v349 = vpop.f32.mrf.mxu0
    %v350 = vadd.f32 %v297, %v349
    %v351 = vpop.f32.mrf.mxu0
    %v352 = vadd.f32 %v299, %v351
    %353 = vmatmul.bf16.gmra.mxu0 %v325
    %v354 = vpop.f32.mrf.mxu0
    %v355 = vadd.f32 %v302, %v354
    %v356 = vpop.f32.mrf.mxu0
    %v357 = vadd.f32 %v304, %v356
    %358 = vdwg.mxu0
    %v359 = vld [vmem:[%s8] sm:$0x1]
    %v361 = vperm.slane %v359, 0
    %v363 = vadd.f32 %v340, %v361
    %v364 = vadd.f32 %v342, %v361
    %v365 = vadd.f32 %v345, %v361
    %v366 = vadd.f32 %v347, %v361
    %v367 = vadd.f32 %v350, %v361
    %v368 = vadd.f32 %v352, %v361
    %v369 = vadd.f32 %v355, %v361
    %v370 = vadd.f32 %v357, %v361
    %371 = vst [vmem:[#allocation2] sm:$0xff] %v363
    %372 = vst [vmem:[#allocation2 + $0x8] sm:$0xff] %v364
    %373 = vst [vmem:[#allocation2 + $0x10] sm:$0xff] %v365
    %374 = vst [vmem:[#allocation2 + $0x18] sm:$0xff] %v366
    %375 = vst [vmem:[#allocation2 + $0x20] sm:$0xff] %v367
    %376 = vst [vmem:[#allocation2 + $0x28] sm:$0xff] %v368
    %377 = vst [vmem:[#allocation2 + $0x30] sm:$0xff] %v369
    %378 = vst [vmem:[#allocation2 + $0x38] sm:$0xff] %v370
    %v379 = vld [vmem:[#allocation11] sm:$0xff]
    %v380 = vld [vmem:[#allocation11 + $0x8] sm:$0xff]
    %v381 = vld [vmem:[#allocation11 + $0x10] sm:$0xff]
    %v382 = vld [vmem:[#allocation11 + $0x18] sm:$0xff]
    %v383 = vld [vmem:[#allocation11 + $0x20] sm:$0xff]
    %v384 = vld [vmem:[#allocation11 + $0x28] sm:$0xff]
    %v385 = vld [vmem:[#allocation11 + $0x30] sm:$0xff]
    %v386 = vld [vmem:[#allocation11 + $0x38] sm:$0xff]
    %v387 = vld [vmem:[%s9] sm:$0xf]
    %v388 = vld [vmem:[%s9 + $0x4] sm:$0xf]
    %v389 = vld [vmem:[%s9 + $0x8] sm:$0xf]
    %v390 = vld [vmem:[%s9 + $0xc] sm:$0xf]
    %v391 = vld [vmem:[%s10] sm:$0x1]
    %v393 = vperm.slane %v391, 0
    %v395 = vld [vmem:[#allocation13] sm:$0xff]
    %s396 = scalar_lea.vmem [#allocation13], 8
    %v397 = vld [vmem:[%s396] sm:$0xff]
    %v398 = vld [vmem:[#allocation15] sm:$0xff]
    %s399 = scalar_lea.vmem [#allocation15], 8
    %v400 = vld [vmem:[%s399] sm:$0xff]
    %402 = vrot.lane.b32.xlu0 %v397, 32
    %v403 = vpop.permute.xlu0 %402
    %vm405 = vcmask 261120
    %v406 = vsel %vm405, %v395, %v403
    %v407 = vpack.c.bf16 %v406, %v406
    %v416 = vunpack.c.l.b16 %v379
    %v417 = vunpack.c.h.b16 %v379
    %v418 = vunpack.c.l.b16 %v380
    %v419 = vunpack.c.h.b16 %v380
    %v420 = vunpack.c.l.b16 %v381
    %v421 = vunpack.c.h.b16 %v381
    %v422 = vunpack.c.l.b16 %v382
    %v423 = vunpack.c.h.b16 %v382
    %v424 = vunpack.c.l.b16 %v383
    %v425 = vunpack.c.h.b16 %v383
    %v426 = vunpack.c.l.b16 %v384
    %v427 = vunpack.c.h.b16 %v384
    %v428 = vunpack.c.l.b16 %v385
    %v429 = vunpack.c.h.b16 %v385
    %v430 = vunpack.c.l.b16 %v386
    %v431 = vunpack.c.h.b16 %v386
    %v432 = vpack.c.b16 %v418, %v416
    %v433 = vpack.c.b16 %v419, %v417
    %v434 = vpack.c.b16 %v422, %v420
    %v435 = vpack.c.b16 %v423, %v421
    %v436 = vpack.c.b16 %v426, %v424
    %v437 = vpack.c.b16 %v427, %v425
    %v438 = vpack.c.b16 %v430, %v428
    %v439 = vpack.c.b16 %v431, %v429
    %vm448 = vcmask 523264
    %v450 = vsel %vm448, %v407, 0
    %452 = vmatpush.bf16.msra.mxu0 0
    %453 = vmatpush.bf16.msra.mxu0 0
    %454 = vmatpush.bf16.msra.mxu0 0
    %455 = vmatpush.bf16.msra.mxu0 0
    %456 = vmatpush.bf16.msra.mxu0 %v438
    %457 = vmatpush.bf16.msra.mxu0 %v436
    %458 = vmatpush.bf16.msra.mxu0 %v434
    %459 = vmatpush.bf16.msra.mxu0 %v432
    %460 = vmatmul.bf16.gmra.mxu0 %v450
    %v461 = vpop.f32.mrf.mxu0
    %v462 = vadd.f32 0.0, %v461
    %v463 = vpop.f32.mrf.mxu0
    %464 = vdwg.mxu0
    %465 = vmatpush.bf16.msra.mxu0 0
    %466 = vmatpush.bf16.msra.mxu0 0
    %467 = vmatpush.bf16.msra.mxu0 0
    %468 = vmatpush.bf16.msra.mxu0 0
    %469 = vmatpush.bf16.msra.mxu0 %v439
    %470 = vmatpush.bf16.msra.mxu0 %v437
    %471 = vmatpush.bf16.msra.mxu0 %v435
    %472 = vmatpush.bf16.msra.mxu0 %v433
    %473 = vmatmul.bf16.gmra.mxu0 %v450
    %v474 = vpop.f32.mrf.mxu0
    %v475 = vadd.f32 0.0, %v474
    %v476 = vpop.f32.mrf.mxu0
    %477 = vdwg.mxu0
    %v478 = vld [vmem:[#allocation2] sm:$0xff]
    %v479 = vadd.f32 %v462, %v478
    %v480 = vxor.u32 %v479, 2147483648
    %v481 = vmul.f32 %v480, 1.442695
    %v482 = vpow.pop %v481
    %v483 = vadd.f32 %v482, 1.0
    %v484 = vrcp.pop %v483
    %v485 = vmul.f32 %v483, %v484
    %v486 = vsub.f32 1.0, %v485
    %v487 = vmul.f32 %v484, %v486
    %v488 = vadd.f32 %v484, %v487
    %vm489 = vweird.f32 %v483
    %vm490 = vweird.f32 %v484
    %vm491 = vmor %vm489, %vm490
    %v492 = vsel %vm491, %v484, %v488
    %v493 = vand.u32 2147483647, %v483
    %vm494 = vcmp.eq.f32.partialorder %v493, 8.507059e+37
    %v495 = vand.u32 %v483, 2147483648
    %v496 = vor.u32 1.1754944e-38, %v495
    %v497 = vsel %vm494, %v496, %v492
    %v498 = vmul.f32 1.0, %v497
    %v499 = vtanh.pop %v479
    %501 = vrot.lane.b32.xlu0 %v398, 32
    %v502 = vpop.permute.xlu0 %501
    %v504 = vmul.f32 %v498, %v502
    %506 = vrot.lane.b32.xlu0 %v499, 32
    %v507 = vpop.permute.xlu0 %506
    %v509 = vmul.f32 %v498, %v507
    %511 = vrot.lane.b32.xlu0 %v509, 32
    %v512 = vpop.permute.xlu0 %511
    %v514 = vadd.f32 %v504, %v512
    %v515 = vtanh.pop %v514
    %517 = vrot.lane.b32.xlu0 %v515, 32
    %v518 = vpop.permute.xlu0 %517
    %v520 = vmul.f32 %v498, %v518
    %v521 = vpack.c.bf16 %v520, %v520
    %523 = vrot.lane.b32.xlu0 %v521, 64
    %v524 = vpop.permute.xlu0 %523
    %v529 = vunpack.c.l.b16 %v387
    %v530 = vunpack.c.l.b16 %v388
    %v531 = vunpack.c.l.b16 %v389
    %v532 = vunpack.c.l.b16 %v390
    %v533 = vpack.c.b16 %v530, %v529
    %v534 = vpack.c.b16 %v532, %v531
    %v538 = vsel %vm405, %v524, 0
    %540 = vmatpush.bf16.msra.mxu0 0
    %541 = vmatpush.bf16.msra.mxu0 0
    %542 = vmatpush.bf16.msra.mxu0 0
    %543 = vmatpush.bf16.msra.mxu0 0
    %544 = vmatpush.bf16.msra.mxu0 0
    %545 = vmatpush.bf16.msra.mxu0 0
    %546 = vmatpush.bf16.msra.mxu0 %v534
    %547 = vmatpush.bf16.msra.mxu0 %v533
    %548 = vmatmul.bf16.gmra.mxu0 %v538
    %v549 = vpop.f32.mrf.mxu0
    %v550 = vadd.f32 0.0, %v549
    %v551 = vpop.f32.mrf.mxu0
    %552 = vdwg.mxu0
    %v553 = vadd.f32 %v475, %v550
    %v554 = vadd.f32 %v553, %v393
    %v555 = vxor.u32 %v554, 2147483648
    %v556 = vmul.f32 %v555, 1.442695
    %v557 = vpow.pop %v556
    %v558 = vadd.f32 %v557, 1.0
    %v559 = vrcp.pop %v558
    %v560 = vmul.f32 %v558, %v559
    %v561 = vsub.f32 1.0, %v560
    %v562 = vmul.f32 %v559, %v561
    %v563 = vadd.f32 %v559, %v562
    %vm564 = vweird.f32 %v558
    %vm565 = vweird.f32 %v559
    %vm566 = vmor %vm564, %vm565
    %v567 = vsel %vm566, %v559, %v563
    %v568 = vand.u32 2147483647, %v558
    %vm569 = vcmp.eq.f32.partialorder %v568, 8.507059e+37
    %v570 = vand.u32 %v558, 2147483648
    %v571 = vor.u32 1.1754944e-38, %v570
    %v572 = vsel %vm569, %v571, %v567
    %v573 = vmul.f32 1.0, %v572
    %v574 = vtanh.pop %v554
    %576 = vrot.lane.b32.xlu0 %v400, 32
    %v577 = vpop.permute.xlu0 %576
    %v579 = vmul.f32 %v573, %v577
    %581 = vrot.lane.b32.xlu0 %v574, 32
    %v582 = vpop.permute.xlu0 %581
    %v584 = vmul.f32 %v573, %v582
    %586 = vrot.lane.b32.xlu0 %v584, 32
    %v587 = vpop.permute.xlu0 %586
    %v589 = vadd.f32 %v579, %v587
    %v590 = vtanh.pop %v589
    %592 = vrot.lane.b32.xlu0 %v590, 32
    %v593 = vpop.permute.xlu0 %592
    %v595 = vmul.f32 %v573, %v593
    %597 = vrot.lane.b32.xlu0 %v520, 64
    %v598 = vpop.permute.xlu0 %597
    %601 = vrot.lane.b32.xlu0 %v595, 96
    %v602 = vpop.permute.xlu0 %601
    %v604 = vsel %vm405, %v598, %v602
    %v605 = vpack.c.bf16 %v604, %v604
    %v607 = vsel %vm448, %v605, 0
    %609 = vmatpush.bf16.msra.mxu0 0
    %610 = vmatpush.bf16.msra.mxu0 0
    %611 = vmatpush.bf16.msra.mxu0 0
    %612 = vmatpush.bf16.msra.mxu0 0
    %613 = vmatpush.bf16.msra.mxu0 %v438
    %614 = vmatpush.bf16.msra.mxu0 %v436
    %615 = vmatpush.bf16.msra.mxu0 %v434
    %616 = vmatpush.bf16.msra.mxu0 %v432
    %617 = vmatmul.bf16.gmra.mxu0 %v607
    %v618 = vpop.f32.mrf.mxu0
    %v619 = vadd.f32 0.0, %v618
    %v620 = vpop.f32.mrf.mxu0
    %621 = vdwg.mxu0
    %622 = vmatpush.bf16.msra.mxu0 0
    %623 = vmatpush.bf16.msra.mxu0 0
    %624 = vmatpush.bf16.msra.mxu0 0
    %625 = vmatpush.bf16.msra.mxu0 0
    %626 = vmatpush.bf16.msra.mxu0 %v439
    %627 = vmatpush.bf16.msra.mxu0 %v437
    %628 = vmatpush.bf16.msra.mxu0 %v435
    %629 = vmatpush.bf16.msra.mxu0 %v433
    %630 = vmatmul.bf16.gmra.mxu0 %v607
    %v631 = vpop.f32.mrf.mxu0
    %v632 = vadd.f32 0.0, %v631
    %v633 = vpop.f32.mrf.mxu0
    %634 = vdwg.mxu0
    %s635 = scalar_lea.vmem [#allocation2], 8
    %v636 = vld [vmem:[%s635] sm:$0xff]
    %v637 = vadd.f32 %v619, %v636
    %v638 = vxor.u32 %v637, 2147483648
    %v639 = vmul.f32 %v638, 1.442695
    %v640 = vpow.pop %v639
    %v641 = vadd.f32 %v640, 1.0
    %v642 = vrcp.pop %v641
    %v643 = vmul.f32 %v641, %v642
    %v644 = vsub.f32 1.0, %v643
    %v645 = vmul.f32 %v642, %v644
    %v646 = vadd.f32 %v642, %v645
    %vm647 = vweird.f32 %v641
    %vm648 = vweird.f32 %v642
    %vm649 = vmor %vm647, %vm648
    %v650 = vsel %vm649, %v642, %v646
    %v651 = vand.u32 2147483647, %v641
    %vm652 = vcmp.eq.f32.partialorder %v651, 8.507059e+37
    %v653 = vand.u32 %v641, 2147483648
    %v654 = vor.u32 1.1754944e-38, %v653
    %v655 = vsel %vm652, %v654, %v650
    %v656 = vmul.f32 1.0, %v655
    %v657 = vtanh.pop %v637
    %v658 = vmul.f32 %v656, %v514
    %660 = vrot.lane.b32.xlu0 %v657, 32
    %v661 = vpop.permute.xlu0 %660
    %v663 = vmul.f32 %v656, %v661
    %665 = vrot.lane.b32.xlu0 %v663, 32
    %v666 = vpop.permute.xlu0 %665
    %v668 = vadd.f32 %v658, %v666
    %v669 = vtanh.pop %v668
    %671 = vrot.lane.b32.xlu0 %v669, 32
    %v672 = vpop.permute.xlu0 %671
    %v674 = vmul.f32 %v656, %v672
    %v675 = vpack.c.bf16 %v674, %v674
    %677 = vrot.lane.b32.xlu0 %v675, 64
    %v678 = vpop.permute.xlu0 %677
    %v680 = vsel %vm405, %v678, 0
    %682 = vmatpush.bf16.msra.mxu0 0
    %683 = vmatpush.bf16.msra.mxu0 0
    %684 = vmatpush.bf16.msra.mxu0 0
    %685 = vmatpush.bf16.msra.mxu0 0
    %686 = vmatpush.bf16.msra.mxu0 0
    %687 = vmatpush.bf16.msra.mxu0 0
    %688 = vmatpush.bf16.msra.mxu0 %v534
    %689 = vmatpush.bf16.msra.mxu0 %v533
    %690 = vmatmul.bf16.gmra.mxu0 %v680
    %v691 = vpop.f32.mrf.mxu0
    %v692 = vadd.f32 0.0, %v691
    %v693 = vpop.f32.mrf.mxu0
    %694 = vdwg.mxu0
    %v695 = vadd.f32 %v632, %v692
    %v696 = vadd.f32 %v695, %v393
    %v697 = vxor.u32 %v696, 2147483648
    %v698 = vmul.f32 %v697, 1.442695
    %v699 = vpow.pop %v698
    %v700 = vadd.f32 %v699, 1.0
    %v701 = vrcp.pop %v700
    %v702 = vmul.f32 %v700, %v701
    %v703 = vsub.f32 1.0, %v702
    %v704 = vmul.f32 %v701, %v703
    %v705 = vadd.f32 %v701, %v704
    %vm706 = vweird.f32 %v700
    %vm707 = vweird.f32 %v701
    %vm708 = vmor %vm706, %vm707
    %v709 = vsel %vm708, %v701, %v705
    %v710 = vand.u32 2147483647, %v700
    %vm711 = vcmp.eq.f32.partialorder %v710, 8.507059e+37
    %v712 = vand.u32 %v700, 2147483648
    %v713 = vor.u32 1.1754944e-38, %v712
    %v714 = vsel %vm711, %v713, %v709
    %v715 = vmul.f32 1.0, %v714
    %v716 = vtanh.pop %v696
    %v717 = vmul.f32 %v715, %v589
    %719 = vrot.lane.b32.xlu0 %v716, 32
    %v720 = vpop.permute.xlu0 %719
    %v722 = vmul.f32 %v715, %v720
    %724 = vrot.lane.b32.xlu0 %v722, 32
    %v725 = vpop.permute.xlu0 %724
    %v727 = vadd.f32 %v717, %v725
    %v728 = vtanh.pop %v727
    %730 = vrot.lane.b32.xlu0 %v728, 32
    %v731 = vpop.permute.xlu0 %730
    %v733 = vmul.f32 %v715, %v731
    %735 = vrot.lane.b32.xlu0 %v674, 64
    %v736 = vpop.permute.xlu0 %735
    %739 = vrot.lane.b32.xlu0 %v733, 96
    %v740 = vpop.permute.xlu0 %739
    %v742 = vsel %vm405, %v736, %v740
    %v743 = vpack.c.bf16 %v742, %v742
    %v745 = vsel %vm448, %v743, 0
    %747 = vmatpush.bf16.msra.mxu0 0
    %748 = vmatpush.bf16.msra.mxu0 0
    %749 = vmatpush.bf16.msra.mxu0 0
    %750 = vmatpush.bf16.msra.mxu0 0
    %751 = vmatpush.bf16.msra.mxu0 %v438
    %752 = vmatpush.bf16.msra.mxu0 %v436
    %753 = vmatpush.bf16.msra.mxu0 %v434
    %754 = vmatpush.bf16.msra.mxu0 %v432
    %755 = vmatmul.bf16.gmra.mxu0 %v745
    %v756 = vpop.f32.mrf.mxu0
    %v757 = vadd.f32 0.0, %v756
    %v758 = vpop.f32.mrf.mxu0
    %759 = vdwg.mxu0
    %760 = vmatpush.bf16.msra.mxu0 0
    %761 = vmatpush.bf16.msra.mxu0 0
    %762 = vmatpush.bf16.msra.mxu0 0
    %763 = vmatpush.bf16.msra.mxu0 0
    %764 = vmatpush.bf16.msra.mxu0 %v439
    %765 = vmatpush.bf16.msra.mxu0 %v437
    %766 = vmatpush.bf16.msra.mxu0 %v435
    %767 = vmatpush.bf16.msra.mxu0 %v433
    %768 = vmatmul.bf16.gmra.mxu0 %v745
    %v769 = vpop.f32.mrf.mxu0
    %v770 = vadd.f32 0.0, %v769
    %v771 = vpop.f32.mrf.mxu0
    %772 = vdwg.mxu0
    %s773 = scalar_lea.vmem [#allocation2], 16
    %v774 = vld [vmem:[%s773] sm:$0xff]
    %v775 = vadd.f32 %v757, %v774
    %v776 = vxor.u32 %v775, 2147483648
    %v777 = vmul.f32 %v776, 1.442695
    %v778 = vpow.pop %v777
    %v779 = vadd.f32 %v778, 1.0
    %v780 = vrcp.pop %v779
    %v781 = vmul.f32 %v779, %v780
    %v782 = vsub.f32 1.0, %v781
    %v783 = vmul.f32 %v780, %v782
    %v784 = vadd.f32 %v780, %v783
    %vm785 = vweird.f32 %v779
    %vm786 = vweird.f32 %v780
    %vm787 = vmor %vm785, %vm786
    %v788 = vsel %vm787, %v780, %v784
    %v789 = vand.u32 2147483647, %v779
    %vm790 = vcmp.eq.f32.partialorder %v789, 8.507059e+37
    %v791 = vand.u32 %v779, 2147483648
    %v792 = vor.u32 1.1754944e-38, %v791
    %v793 = vsel %vm790, %v792, %v788
    %v794 = vmul.f32 1.0, %v793
    %v795 = vtanh.pop %v775
    %v796 = vmul.f32 %v794, %v668
    %798 = vrot.lane.b32.xlu0 %v795, 32
    %v799 = vpop.permute.xlu0 %798
    %v801 = vmul.f32 %v794, %v799
    %803 = vrot.lane.b32.xlu0 %v801, 32
    %v804 = vpop.permute.xlu0 %803
    %v806 = vadd.f32 %v796, %v804
    %v807 = vtanh.pop %v806
    %809 = vrot.lane.b32.xlu0 %v807, 32
    %v810 = vpop.permute.xlu0 %809
    %v812 = vmul.f32 %v794, %v810
    %v813 = vpack.c.bf16 %v812, %v812
    %815 = vrot.lane.b32.xlu0 %v813, 64
    %v816 = vpop.permute.xlu0 %815
    %v818 = vsel %vm405, %v816, 0
    %820 = vmatpush.bf16.msra.mxu0 0
    %821 = vmatpush.bf16.msra.mxu0 0
    %822 = vmatpush.bf16.msra.mxu0 0
    %823 = vmatpush.bf16.msra.mxu0 0
    %824 = vmatpush.bf16.msra.mxu0 0
    %825 = vmatpush.bf16.msra.mxu0 0
    %826 = vmatpush.bf16.msra.mxu0 %v534
    %827 = vmatpush.bf16.msra.mxu0 %v533
    %828 = vmatmul.bf16.gmra.mxu0 %v818
    %v829 = vpop.f32.mrf.mxu0
    %v830 = vadd.f32 0.0, %v829
    %v831 = vpop.f32.mrf.mxu0
    %832 = vdwg.mxu0
    %v833 = vadd.f32 %v770, %v830
    %v834 = vadd.f32 %v833, %v393
    %v835 = vxor.u32 %v834, 2147483648
    %v836 = vmul.f32 %v835, 1.442695
    %v837 = vpow.pop %v836
    %v838 = vadd.f32 %v837, 1.0
    %v839 = vrcp.pop %v838
    %v840 = vmul.f32 %v838, %v839
    %v841 = vsub.f32 1.0, %v840
    %v842 = vmul.f32 %v839, %v841
    %v843 = vadd.f32 %v839, %v842
    %vm844 = vweird.f32 %v838
    %vm845 = vweird.f32 %v839
    %vm846 = vmor %vm844, %vm845
    %v847 = vsel %vm846, %v839, %v843
    %v848 = vand.u32 2147483647, %v838
    %vm849 = vcmp.eq.f32.partialorder %v848, 8.507059e+37
    %v850 = vand.u32 %v838, 2147483648
    %v851 = vor.u32 1.1754944e-38, %v850
    %v852 = vsel %vm849, %v851, %v847
    %v853 = vmul.f32 1.0, %v852
    %v854 = vtanh.pop %v834
    %v855 = vmul.f32 %v853, %v727
    %857 = vrot.lane.b32.xlu0 %v854, 32
    %v858 = vpop.permute.xlu0 %857
    %v860 = vmul.f32 %v853, %v858
    %862 = vrot.lane.b32.xlu0 %v860, 32
    %v863 = vpop.permute.xlu0 %862
    %v865 = vadd.f32 %v855, %v863
    %v866 = vtanh.pop %v865
    %868 = vrot.lane.b32.xlu0 %v866, 32
    %v869 = vpop.permute.xlu0 %868
    %v871 = vmul.f32 %v853, %v869
    %873 = vrot.lane.b32.xlu0 %v812, 64
    %v874 = vpop.permute.xlu0 %873
    %877 = vrot.lane.b32.xlu0 %v871, 96
    %v878 = vpop.permute.xlu0 %877
    %v880 = vsel %vm405, %v874, %v878
    %v881 = vpack.c.bf16 %v880, %v880
    %v883 = vsel %vm448, %v881, 0
    %885 = vmatpush.bf16.msra.mxu0 0
    %886 = vmatpush.bf16.msra.mxu0 0
    %887 = vmatpush.bf16.msra.mxu0 0
    %888 = vmatpush.bf16.msra.mxu0 0
    %889 = vmatpush.bf16.msra.mxu0 %v438
    %890 = vmatpush.bf16.msra.mxu0 %v436
    %891 = vmatpush.bf16.msra.mxu0 %v434
    %892 = vmatpush.bf16.msra.mxu0 %v432
    %893 = vmatmul.bf16.gmra.mxu0 %v883
    %v894 = vpop.f32.mrf.mxu0
    %v895 = vadd.f32 0.0, %v894
    %v896 = vpop.f32.mrf.mxu0
    %897 = vdwg.mxu0
    %898 = vmatpush.bf16.msra.mxu0 0
    %899 = vmatpush.bf16.msra.mxu0 0
    %900 = vmatpush.bf16.msra.mxu0 0
    %901 = vmatpush.bf16.msra.mxu0 0
    %902 = vmatpush.bf16.msra.mxu0 %v439
    %903 = vmatpush.bf16.msra.mxu0 %v437
    %904 = vmatpush.bf16.msra.mxu0 %v435
    %905 = vmatpush.bf16.msra.mxu0 %v433
    %906 = vmatmul.bf16.gmra.mxu0 %v883
    %v907 = vpop.f32.mrf.mxu0
    %v908 = vadd.f32 0.0, %v907
    %v909 = vpop.f32.mrf.mxu0
    %910 = vdwg.mxu0
    %s911 = scalar_lea.vmem [#allocation2], 24
    %v912 = vld [vmem:[%s911] sm:$0xff]
    %v913 = vadd.f32 %v895, %v912
    %v914 = vxor.u32 %v913, 2147483648
    %v915 = vmul.f32 %v914, 1.442695
    %v916 = vpow.pop %v915
    %v917 = vadd.f32 %v916, 1.0
    %v918 = vrcp.pop %v917
    %v919 = vmul.f32 %v917, %v918
    %v920 = vsub.f32 1.0, %v919
    %v921 = vmul.f32 %v918, %v920
    %v922 = vadd.f32 %v918, %v921
    %vm923 = vweird.f32 %v917
    %vm924 = vweird.f32 %v918
    %vm925 = vmor %vm923, %vm924
    %v926 = vsel %vm925, %v918, %v922
    %v927 = vand.u32 2147483647, %v917
    %vm928 = vcmp.eq.f32.partialorder %v927, 8.507059e+37
    %v929 = vand.u32 %v917, 2147483648
    %v930 = vor.u32 1.1754944e-38, %v929
    %v931 = vsel %vm928, %v930, %v926
    %v932 = vmul.f32 1.0, %v931
    %v933 = vtanh.pop %v913
    %v934 = vmul.f32 %v932, %v806
    %936 = vrot.lane.b32.xlu0 %v933, 32
    %v937 = vpop.permute.xlu0 %936
    %v939 = vmul.f32 %v932, %v937
    %941 = vrot.lane.b32.xlu0 %v939, 32
    %v942 = vpop.permute.xlu0 %941
    %v944 = vadd.f32 %v934, %v942
    %v945 = vtanh.pop %v944
    %947 = vrot.lane.b32.xlu0 %v945, 32
    %v948 = vpop.permute.xlu0 %947
    %v950 = vmul.f32 %v932, %v948
    %v951 = vpack.c.bf16 %v950, %v950
    %953 = vrot.lane.b32.xlu0 %v951, 64
    %v954 = vpop.permute.xlu0 %953
    %v956 = vsel %vm405, %v954, 0
    %958 = vmatpush.bf16.msra.mxu0 0
    %959 = vmatpush.bf16.msra.mxu0 0
    %960 = vmatpush.bf16.msra.mxu0 0
    %961 = vmatpush.bf16.msra.mxu0 0
    %962 = vmatpush.bf16.msra.mxu0 0
    %963 = vmatpush.bf16.msra.mxu0 0
    %964 = vmatpush.bf16.msra.mxu0 %v534
    %965 = vmatpush.bf16.msra.mxu0 %v533
    %966 = vmatmul.bf16.gmra.mxu0 %v956
    %v967 = vpop.f32.mrf.mxu0
    %v968 = vadd.f32 0.0, %v967
    %v969 = vpop.f32.mrf.mxu0
    %970 = vdwg.mxu0
    %v971 = vadd.f32 %v908, %v968
    %v972 = vadd.f32 %v971, %v393
    %v973 = vxor.u32 %v972, 2147483648
    %v974 = vmul.f32 %v973, 1.442695
    %v975 = vpow.pop %v974
    %v976 = vadd.f32 %v975, 1.0
    %v977 = vrcp.pop %v976
    %v978 = vmul.f32 %v976, %v977
    %v979 = vsub.f32 1.0, %v978
    %v980 = vmul.f32 %v977, %v979
    %v981 = vadd.f32 %v977, %v980
    %vm982 = vweird.f32 %v976
    %vm983 = vweird.f32 %v977
    %vm984 = vmor %vm982, %vm983
    %v985 = vsel %vm984, %v977, %v981
    %v986 = vand.u32 2147483647, %v976
    %vm987 = vcmp.eq.f32.partialorder %v986, 8.507059e+37
    %v988 = vand.u32 %v976, 2147483648
    %v989 = vor.u32 1.1754944e-38, %v988
    %v990 = vsel %vm987, %v989, %v985
    %v991 = vmul.f32 1.0, %v990
    %v992 = vtanh.pop %v972
    %v993 = vmul.f32 %v991, %v865
    %995 = vrot.lane.b32.xlu0 %v992, 32
    %v996 = vpop.permute.xlu0 %995
    %v998 = vmul.f32 %v991, %v996
    %1000 = vrot.lane.b32.xlu0 %v998, 32
    %v1001 = vpop.permute.xlu0 %1000
    %v1003 = vadd.f32 %v993, %v1001
    %v1004 = vtanh.pop %v1003
    %1006 = vrot.lane.b32.xlu0 %v1004, 32
    %v1007 = vpop.permute.xlu0 %1006
    %v1009 = vmul.f32 %v991, %v1007
    %1010 = vrot.lane.b32.xlu0 %v595, 64
    %v1011 = vpop.permute.xlu0 %1010
    %1014 = vrot.lane.b32.xlu0 %v1009, 32
    %v1015 = vpop.permute.xlu0 %1014
    %v1017 = vsel %vm405, %v1011, %v740
    %v1018 = vsel %vm448, %v1017, %v871
    %vm1019 = vcmask 785408
    %v1020 = vsel %vm1019, %v1018, %v1015
    %1021 = vst [vmem:[#allocation12] sm:$0xff] %v1020
    %1023 = vrot.lane.b32.xlu0 %v950, 64
    %v1024 = vpop.permute.xlu0 %1023
    %1026 = vrot.lane.b32.xlu0 %v1009, 96
    %v1027 = vpop.permute.xlu0 %1026
    %v1029 = vsel %vm405, %v1024, %v1027
    %v1030 = vpack.c.bf16 %v1029, %v1029
    %v1032 = vsel %vm448, %v1030, 0
    %1034 = vmatpush.bf16.msra.mxu0 0
    %1035 = vmatpush.bf16.msra.mxu0 0
    %1036 = vmatpush.bf16.msra.mxu0 0
    %1037 = vmatpush.bf16.msra.mxu0 0
    %1038 = vmatpush.bf16.msra.mxu0 %v438
    %1039 = vmatpush.bf16.msra.mxu0 %v436
    %1040 = vmatpush.bf16.msra.mxu0 %v434
    %1041 = vmatpush.bf16.msra.mxu0 %v432
    %1042 = vmatmul.bf16.gmra.mxu0 %v1032
    %v1043 = vpop.f32.mrf.mxu0
    %v1044 = vadd.f32 0.0, %v1043
    %v1045 = vpop.f32.mrf.mxu0
    %1046 = vdwg.mxu0
    %1047 = vmatpush.bf16.msra.mxu0 0
    %1048 = vmatpush.bf16.msra.mxu0 0
    %1049 = vmatpush.bf16.msra.mxu0 0
    %1050 = vmatpush.bf16.msra.mxu0 0
    %1051 = vmatpush.bf16.msra.mxu0 %v439
    %1052 = vmatpush.bf16.msra.mxu0 %v437
    %1053 = vmatpush.bf16.msra.mxu0 %v435
    %1054 = vmatpush.bf16.msra.mxu0 %v433
    %1055 = vmatmul.bf16.gmra.mxu0 %v1032
    %v1056 = vpop.f32.mrf.mxu0
    %v1057 = vadd.f32 0.0, %v1056
    %v1058 = vpop.f32.mrf.mxu0
    %1059 = vdwg.mxu0
    %s1060 = scalar_lea.vmem [#allocation2], 32
    %v1061 = vld [vmem:[%s1060] sm:$0xff]
    %v1062 = vadd.f32 %v1044, %v1061
    %v1063 = vxor.u32 %v1062, 2147483648
    %v1064 = vmul.f32 %v1063, 1.442695
    %v1065 = vpow.pop %v1064
    %v1066 = vadd.f32 %v1065, 1.0
    %v1067 = vrcp.pop %v1066
    %v1068 = vmul.f32 %v1066, %v1067
    %v1069 = vsub.f32 1.0, %v1068
    %v1070 = vmul.f32 %v1067, %v1069
    %v1071 = vadd.f32 %v1067, %v1070
    %vm1072 = vweird.f32 %v1066
    %vm1073 = vweird.f32 %v1067
    %vm1074 = vmor %vm1072, %vm1073
    %v1075 = vsel %vm1074, %v1067, %v1071
    %v1076 = vand.u32 2147483647, %v1066
    %vm1077 = vcmp.eq.f32.partialorder %v1076, 8.507059e+37
    %v1078 = vand.u32 %v1066, 2147483648
    %v1079 = vor.u32 1.1754944e-38, %v1078
    %v1080 = vsel %vm1077, %v1079, %v1075
    %v1081 = vmul.f32 1.0, %v1080
    %v1082 = vtanh.pop %v1062
    %v1083 = vmul.f32 %v1081, %v944
    %1085 = vrot.lane.b32.xlu0 %v1082, 32
    %v1086 = vpop.permute.xlu0 %1085
    %v1088 = vmul.f32 %v1081, %v1086
    %1090 = vrot.lane.b32.xlu0 %v1088, 32
    %v1091 = vpop.permute.xlu0 %1090
    %v1093 = vadd.f32 %v1083, %v1091
    %v1094 = vtanh.pop %v1093
    %1096 = vrot.lane.b32.xlu0 %v1094, 32
    %v1097 = vpop.permute.xlu0 %1096
    %v1099 = vmul.f32 %v1081, %v1097
    %v1100 = vpack.c.bf16 %v1099, %v1099
    %1102 = vrot.lane.b32.xlu0 %v1100, 64
    %v1103 = vpop.permute.xlu0 %1102
    %v1105 = vsel %vm405, %v1103, 0
    %1107 = vmatpush.bf16.msra.mxu0 0
    %1108 = vmatpush.bf16.msra.mxu0 0
    %1109 = vmatpush.bf16.msra.mxu0 0
    %1110 = vmatpush.bf16.msra.mxu0 0
    %1111 = vmatpush.bf16.msra.mxu0 0
    %1112 = vmatpush.bf16.msra.mxu0 0
    %1113 = vmatpush.bf16.msra.mxu0 %v534
    %1114 = vmatpush.bf16.msra.mxu0 %v533
    %1115 = vmatmul.bf16.gmra.mxu0 %v1105
    %v1116 = vpop.f32.mrf.mxu0
    %v1117 = vadd.f32 0.0, %v1116
    %v1118 = vpop.f32.mrf.mxu0
    %1119 = vdwg.mxu0
    %v1120 = vadd.f32 %v1057, %v1117
    %v1121 = vadd.f32 %v1120, %v393
    %v1122 = vxor.u32 %v1121, 2147483648
    %v1123 = vmul.f32 %v1122, 1.442695
    %v1124 = vpow.pop %v1123
    %v1125 = vadd.f32 %v1124, 1.0
    %v1126 = vrcp.pop %v1125
    %v1127 = vmul.f32 %v1125, %v1126
    %v1128 = vsub.f32 1.0, %v1127
    %v1129 = vmul.f32 %v1126, %v1128
    %v1130 = vadd.f32 %v1126, %v1129
    %vm1131 = vweird.f32 %v1125
    %vm1132 = vweird.f32 %v1126
    %vm1133 = vmor %vm1131, %vm1132
    %v1134 = vsel %vm1133, %v1126, %v1130
    %v1135 = vand.u32 2147483647, %v1125
    %vm1136 = vcmp.eq.f32.partialorder %v1135, 8.507059e+37
    %v1137 = vand.u32 %v1125, 2147483648
    %v1138 = vor.u32 1.1754944e-38, %v1137
    %v1139 = vsel %vm1136, %v1138, %v1134
    %v1140 = vmul.f32 1.0, %v1139
    %v1141 = vtanh.pop %v1121
    %v1142 = vmul.f32 %v1140, %v1003
    %1144 = vrot.lane.b32.xlu0 %v1141, 32
    %v1145 = vpop.permute.xlu0 %1144
    %v1147 = vmul.f32 %v1140, %v1145
    %1149 = vrot.lane.b32.xlu0 %v1147, 32
    %v1150 = vpop.permute.xlu0 %1149
    %v1152 = vadd.f32 %v1142, %v1150
    %v1153 = vtanh.pop %v1152
    %1155 = vrot.lane.b32.xlu0 %v1153, 32
    %v1156 = vpop.permute.xlu0 %1155
    %v1158 = vmul.f32 %v1140, %v1156
    %1160 = vrot.lane.b32.xlu0 %v1099, 64
    %v1161 = vpop.permute.xlu0 %1160
    %1164 = vrot.lane.b32.xlu0 %v1158, 96
    %v1165 = vpop.permute.xlu0 %1164
    %v1167 = vsel %vm405, %v1161, %v1165
    %v1168 = vpack.c.bf16 %v1167, %v1167
    %v1170 = vsel %vm448, %v1168, 0
    %1172 = vmatpush.bf16.msra.mxu0 0
    %1173 = vmatpush.bf16.msra.mxu0 0
    %1174 = vmatpush.bf16.msra.mxu0 0
    %1175 = vmatpush.bf16.msra.mxu0 0
    %1176 = vmatpush.bf16.msra.mxu0 %v438
    %1177 = vmatpush.bf16.msra.mxu0 %v436
    %1178 = vmatpush.bf16.msra.mxu0 %v434
    %1179 = vmatpush.bf16.msra.mxu0 %v432
    %1180 = vmatmul.bf16.gmra.mxu0 %v1170
    %v1181 = vpop.f32.mrf.mxu0
    %v1182 = vadd.f32 0.0, %v1181
    %v1183 = vpop.f32.mrf.mxu0
    %1184 = vdwg.mxu0
    %1185 = vmatpush.bf16.msra.mxu0 0
    %1186 = vmatpush.bf16.msra.mxu0 0
    %1187 = vmatpush.bf16.msra.mxu0 0
    %1188 = vmatpush.bf16.msra.mxu0 0
    %1189 = vmatpush.bf16.msra.mxu0 %v439
    %1190 = vmatpush.bf16.msra.mxu0 %v437
    %1191 = vmatpush.bf16.msra.mxu0 %v435
    %1192 = vmatpush.bf16.msra.mxu0 %v433
    %1193 = vmatmul.bf16.gmra.mxu0 %v1170
    %v1194 = vpop.f32.mrf.mxu0
    %v1195 = vadd.f32 0.0, %v1194
    %v1196 = vpop.f32.mrf.mxu0
    %1197 = vdwg.mxu0
    %s1198 = scalar_lea.vmem [#allocation2], 40
    %v1199 = vld [vmem:[%s1198] sm:$0xff]
    %v1200 = vadd.f32 %v1182, %v1199
    %v1201 = vxor.u32 %v1200, 2147483648
    %v1202 = vmul.f32 %v1201, 1.442695
    %v1203 = vpow.pop %v1202
    %v1204 = vadd.f32 %v1203, 1.0
    %v1205 = vrcp.pop %v1204
    %v1206 = vmul.f32 %v1204, %v1205
    %v1207 = vsub.f32 1.0, %v1206
    %v1208 = vmul.f32 %v1205, %v1207
    %v1209 = vadd.f32 %v1205, %v1208
    %vm1210 = vweird.f32 %v1204
    %vm1211 = vweird.f32 %v1205
    %vm1212 = vmor %vm1210, %vm1211
    %v1213 = vsel %vm1212, %v1205, %v1209
    %v1214 = vand.u32 2147483647, %v1204
    %vm1215 = vcmp.eq.f32.partialorder %v1214, 8.507059e+37
    %v1216 = vand.u32 %v1204, 2147483648
    %v1217 = vor.u32 1.1754944e-38, %v1216
    %v1218 = vsel %vm1215, %v1217, %v1213
    %v1219 = vmul.f32 1.0, %v1218
    %v1220 = vtanh.pop %v1200
    %v1221 = vmul.f32 %v1219, %v1093
    %1223 = vrot.lane.b32.xlu0 %v1220, 32
    %v1224 = vpop.permute.xlu0 %1223
    %v1226 = vmul.f32 %v1219, %v1224
    %1228 = vrot.lane.b32.xlu0 %v1226, 32
    %v1229 = vpop.permute.xlu0 %1228
    %v1231 = vadd.f32 %v1221, %v1229
    %v1232 = vtanh.pop %v1231
    %1234 = vrot.lane.b32.xlu0 %v1232, 32
    %v1235 = vpop.permute.xlu0 %1234
    %v1237 = vmul.f32 %v1219, %v1235
    %v1238 = vpack.c.bf16 %v1237, %v1237
    %1240 = vrot.lane.b32.xlu0 %v1238, 64
    %v1241 = vpop.permute.xlu0 %1240
    %v1243 = vsel %vm405, %v1241, 0
    %1245 = vmatpush.bf16.msra.mxu0 0
    %1246 = vmatpush.bf16.msra.mxu0 0
    %1247 = vmatpush.bf16.msra.mxu0 0
    %1248 = vmatpush.bf16.msra.mxu0 0
    %1249 = vmatpush.bf16.msra.mxu0 0
    %1250 = vmatpush.bf16.msra.mxu0 0
    %1251 = vmatpush.bf16.msra.mxu0 %v534
    %1252 = vmatpush.bf16.msra.mxu0 %v533
    %1253 = vmatmul.bf16.gmra.mxu0 %v1243
    %v1254 = vpop.f32.mrf.mxu0
    %v1255 = vadd.f32 0.0, %v1254
    %v1256 = vpop.f32.mrf.mxu0
    %1257 = vdwg.mxu0
    %v1258 = vadd.f32 %v1195, %v1255
    %v1259 = vadd.f32 %v1258, %v393
    %v1260 = vxor.u32 %v1259, 2147483648
    %v1261 = vmul.f32 %v1260, 1.442695
    %v1262 = vpow.pop %v1261
    %v1263 = vadd.f32 %v1262, 1.0
    %v1264 = vrcp.pop %v1263
    %v1265 = vmul.f32 %v1263, %v1264
    %v1266 = vsub.f32 1.0, %v1265
    %v1267 = vmul.f32 %v1264, %v1266
    %v1268 = vadd.f32 %v1264, %v1267
    %vm1269 = vweird.f32 %v1263
    %vm1270 = vweird.f32 %v1264
    %vm1271 = vmor %vm1269, %vm1270
    %v1272 = vsel %vm1271, %v1264, %v1268
    %v1273 = vand.u32 2147483647, %v1263
    %vm1274 = vcmp.eq.f32.partialorder %v1273, 8.507059e+37
    %v1275 = vand.u32 %v1263, 2147483648
    %v1276 = vor.u32 1.1754944e-38, %v1275
    %v1277 = vsel %vm1274, %v1276, %v1272
    %v1278 = vmul.f32 1.0, %v1277
    %v1279 = vtanh.pop %v1259
    %v1280 = vmul.f32 %v1278, %v1152
    %1282 = vrot.lane.b32.xlu0 %v1279, 32
    %v1283 = vpop.permute.xlu0 %1282
    %v1285 = vmul.f32 %v1278, %v1283
    %1287 = vrot.lane.b32.xlu0 %v1285, 32
    %v1288 = vpop.permute.xlu0 %1287
    %v1290 = vadd.f32 %v1280, %v1288
    %v1291 = vtanh.pop %v1290
    %1293 = vrot.lane.b32.xlu0 %v1291, 32
    %v1294 = vpop.permute.xlu0 %1293
    %v1296 = vmul.f32 %v1278, %v1294
    %1298 = vrot.lane.b32.xlu0 %v1237, 64
    %v1299 = vpop.permute.xlu0 %1298
    %1302 = vrot.lane.b32.xlu0 %v1296, 96
    %v1303 = vpop.permute.xlu0 %1302
    %v1305 = vsel %vm405, %v1299, %v1303
    %v1306 = vpack.c.bf16 %v1305, %v1305
    %v1308 = vsel %vm448, %v1306, 0
    %1310 = vmatpush.bf16.msra.mxu0 0
    %1311 = vmatpush.bf16.msra.mxu0 0
    %1312 = vmatpush.bf16.msra.mxu0 0
    %1313 = vmatpush.bf16.msra.mxu0 0
    %1314 = vmatpush.bf16.msra.mxu0 %v438
    %1315 = vmatpush.bf16.msra.mxu0 %v436
    %1316 = vmatpush.bf16.msra.mxu0 %v434
    %1317 = vmatpush.bf16.msra.mxu0 %v432
    %1318 = vmatmul.bf16.gmra.mxu0 %v1308
    %v1319 = vpop.f32.mrf.mxu0
    %v1320 = vadd.f32 0.0, %v1319
    %v1321 = vpop.f32.mrf.mxu0
    %1322 = vdwg.mxu0
    %1323 = vmatpush.bf16.msra.mxu0 0
    %1324 = vmatpush.bf16.msra.mxu0 0
    %1325 = vmatpush.bf16.msra.mxu0 0
    %1326 = vmatpush.bf16.msra.mxu0 0
    %1327 = vmatpush.bf16.msra.mxu0 %v439
    %1328 = vmatpush.bf16.msra.mxu0 %v437
    %1329 = vmatpush.bf16.msra.mxu0 %v435
    %1330 = vmatpush.bf16.msra.mxu0 %v433
    %1331 = vmatmul.bf16.gmra.mxu0 %v1308
    %v1332 = vpop.f32.mrf.mxu0
    %v1333 = vadd.f32 0.0, %v1332
    %v1334 = vpop.f32.mrf.mxu0
    %1335 = vdwg.mxu0
    %s1336 = scalar_lea.vmem [#allocation2], 48
    %v1337 = vld [vmem:[%s1336] sm:$0xff]
    %v1338 = vadd.f32 %v1320, %v1337
    %v1339 = vxor.u32 %v1338, 2147483648
    %v1340 = vmul.f32 %v1339, 1.442695
    %v1341 = vpow.pop %v1340
    %v1342 = vadd.f32 %v1341, 1.0
    %v1343 = vrcp.pop %v1342
    %v1344 = vmul.f32 %v1342, %v1343
    %v1345 = vsub.f32 1.0, %v1344
    %v1346 = vmul.f32 %v1343, %v1345
    %v1347 = vadd.f32 %v1343, %v1346
    %vm1348 = vweird.f32 %v1342
    %vm1349 = vweird.f32 %v1343
    %vm1350 = vmor %vm1348, %vm1349
    %v1351 = vsel %vm1350, %v1343, %v1347
    %v1352 = vand.u32 2147483647, %v1342
    %vm1353 = vcmp.eq.f32.partialorder %v1352, 8.507059e+37
    %v1354 = vand.u32 %v1342, 2147483648
    %v1355 = vor.u32 1.1754944e-38, %v1354
    %v1356 = vsel %vm1353, %v1355, %v1351
    %v1357 = vmul.f32 1.0, %v1356
    %v1358 = vtanh.pop %v1338
    %v1359 = vmul.f32 %v1357, %v1231
    %1361 = vrot.lane.b32.xlu0 %v1358, 32
    %v1362 = vpop.permute.xlu0 %1361
    %v1364 = vmul.f32 %v1357, %v1362
    %1366 = vrot.lane.b32.xlu0 %v1364, 32
    %v1367 = vpop.permute.xlu0 %1366
    %v1369 = vadd.f32 %v1359, %v1367
    %v1370 = vtanh.pop %v1369
    %1372 = vrot.lane.b32.xlu0 %v1370, 32
    %v1373 = vpop.permute.xlu0 %1372
    %v1375 = vmul.f32 %v1357, %v1373
    %v1376 = vpack.c.bf16 %v1375, %v1375
    %1378 = vrot.lane.b32.xlu0 %v1376, 64
    %v1379 = vpop.permute.xlu0 %1378
    %v1381 = vsel %vm405, %v1379, 0
    %1383 = vmatpush.bf16.msra.mxu0 0
    %1384 = vmatpush.bf16.msra.mxu0 0
    %1385 = vmatpush.bf16.msra.mxu0 0
    %1386 = vmatpush.bf16.msra.mxu0 0
    %1387 = vmatpush.bf16.msra.mxu0 0
    %1388 = vmatpush.bf16.msra.mxu0 0
    %1389 = vmatpush.bf16.msra.mxu0 %v534
    %1390 = vmatpush.bf16.msra.mxu0 %v533
    %1391 = vmatmul.bf16.gmra.mxu0 %v1381
    %v1392 = vpop.f32.mrf.mxu0
    %v1393 = vadd.f32 0.0, %v1392
    %v1394 = vpop.f32.mrf.mxu0
    %1395 = vdwg.mxu0
    %v1396 = vadd.f32 %v1333, %v1393
    %v1397 = vadd.f32 %v1396, %v393
    %v1398 = vxor.u32 %v1397, 2147483648
    %v1399 = vmul.f32 %v1398, 1.442695
    %v1400 = vpow.pop %v1399
    %v1401 = vadd.f32 %v1400, 1.0
    %v1402 = vrcp.pop %v1401
    %v1403 = vmul.f32 %v1401, %v1402
    %v1404 = vsub.f32 1.0, %v1403
    %v1405 = vmul.f32 %v1402, %v1404
    %v1406 = vadd.f32 %v1402, %v1405
    %vm1407 = vweird.f32 %v1401
    %vm1408 = vweird.f32 %v1402
    %vm1409 = vmor %vm1407, %vm1408
    %v1410 = vsel %vm1409, %v1402, %v1406
    %v1411 = vand.u32 2147483647, %v1401
    %vm1412 = vcmp.eq.f32.partialorder %v1411, 8.507059e+37
    %v1413 = vand.u32 %v1401, 2147483648
    %v1414 = vor.u32 1.1754944e-38, %v1413
    %v1415 = vsel %vm1412, %v1414, %v1410
    %v1416 = vmul.f32 1.0, %v1415
    %v1417 = vtanh.pop %v1397
    %v1418 = vmul.f32 %v1416, %v1290
    %1420 = vrot.lane.b32.xlu0 %v1417, 32
    %v1421 = vpop.permute.xlu0 %1420
    %v1423 = vmul.f32 %v1416, %v1421
    %1425 = vrot.lane.b32.xlu0 %v1423, 32
    %v1426 = vpop.permute.xlu0 %1425
    %v1428 = vadd.f32 %v1418, %v1426
    %v1429 = vtanh.pop %v1428
    %1431 = vrot.lane.b32.xlu0 %v1429, 32
    %v1432 = vpop.permute.xlu0 %1431
    %v1434 = vmul.f32 %v1416, %v1432
    %1436 = vrot.lane.b32.xlu0 %v1375, 64
    %v1437 = vpop.permute.xlu0 %1436
    %1440 = vrot.lane.b32.xlu0 %v1434, 96
    %v1441 = vpop.permute.xlu0 %1440
    %v1443 = vsel %vm405, %v1437, %v1441
    %v1444 = vpack.c.bf16 %v1443, %v1443
    %v1446 = vsel %vm448, %v1444, 0
    %1448 = vmatpush.bf16.msra.mxu0 0
    %1449 = vmatpush.bf16.msra.mxu0 0
    %1450 = vmatpush.bf16.msra.mxu0 0
    %1451 = vmatpush.bf16.msra.mxu0 0
    %1452 = vmatpush.bf16.msra.mxu0 %v438
    %1453 = vmatpush.bf16.msra.mxu0 %v436
    %1454 = vmatpush.bf16.msra.mxu0 %v434
    %1455 = vmatpush.bf16.msra.mxu0 %v432
    %1456 = vmatmul.bf16.gmra.mxu0 %v1446
    %v1457 = vpop.f32.mrf.mxu0
    %v1458 = vadd.f32 0.0, %v1457
    %v1459 = vpop.f32.mrf.mxu0
    %1460 = vdwg.mxu0
    %1461 = vmatpush.bf16.msra.mxu0 0
    %1462 = vmatpush.bf16.msra.mxu0 0
    %1463 = vmatpush.bf16.msra.mxu0 0
    %1464 = vmatpush.bf16.msra.mxu0 0
    %1465 = vmatpush.bf16.msra.mxu0 %v439
    %1466 = vmatpush.bf16.msra.mxu0 %v437
    %1467 = vmatpush.bf16.msra.mxu0 %v435
    %1468 = vmatpush.bf16.msra.mxu0 %v433
    %1469 = vmatmul.bf16.gmra.mxu0 %v1446
    %v1470 = vpop.f32.mrf.mxu0
    %v1471 = vadd.f32 0.0, %v1470
    %v1472 = vpop.f32.mrf.mxu0
    %1473 = vdwg.mxu0
    %s1474 = scalar_lea.vmem [#allocation2], 56
    %v1475 = vld [vmem:[%s1474] sm:$0xff]
    %v1476 = vadd.f32 %v1458, %v1475
    %v1477 = vxor.u32 %v1476, 2147483648
    %v1478 = vmul.f32 %v1477, 1.442695
    %v1479 = vpow.pop %v1478
    %v1480 = vadd.f32 %v1479, 1.0
    %v1481 = vrcp.pop %v1480
    %v1482 = vmul.f32 %v1480, %v1481
    %v1483 = vsub.f32 1.0, %v1482
    %v1484 = vmul.f32 %v1481, %v1483
    %v1485 = vadd.f32 %v1481, %v1484
    %vm1486 = vweird.f32 %v1480
    %vm1487 = vweird.f32 %v1481
    %vm1488 = vmor %vm1486, %vm1487
    %v1489 = vsel %vm1488, %v1481, %v1485
    %v1490 = vand.u32 2147483647, %v1480
    %vm1491 = vcmp.eq.f32.partialorder %v1490, 8.507059e+37
    %v1492 = vand.u32 %v1480, 2147483648
    %v1493 = vor.u32 1.1754944e-38, %v1492
    %v1494 = vsel %vm1491, %v1493, %v1489
    %v1495 = vmul.f32 1.0, %v1494
    %v1496 = vtanh.pop %v1476
    %v1497 = vmul.f32 %v1495, %v1369
    %1499 = vrot.lane.b32.xlu0 %v1496, 32
    %v1500 = vpop.permute.xlu0 %1499
    %v1502 = vmul.f32 %v1495, %v1500
    %1504 = vrot.lane.b32.xlu0 %v1502, 32
    %v1505 = vpop.permute.xlu0 %1504
    %v1507 = vadd.f32 %v1497, %v1505
    %v1508 = vtanh.pop %v1507
    %1510 = vrot.lane.b32.xlu0 %v1508, 32
    %v1511 = vpop.permute.xlu0 %1510
    %v1513 = vmul.f32 %v1495, %v1511
    %v1514 = vpack.c.bf16 %v1513, %v1513
    %1516 = vrot.lane.b32.xlu0 %v1514, 64
    %v1517 = vpop.permute.xlu0 %1516
    %v1519 = vsel %vm405, %v1517, 0
    %1521 = vmatpush.bf16.msra.mxu0 0
    %1522 = vmatpush.bf16.msra.mxu0 0
    %1523 = vmatpush.bf16.msra.mxu0 0
    %1524 = vmatpush.bf16.msra.mxu0 0
    %1525 = vmatpush.bf16.msra.mxu0 0
    %1526 = vmatpush.bf16.msra.mxu0 0
    %1527 = vmatpush.bf16.msra.mxu0 %v534
    %1528 = vmatpush.bf16.msra.mxu0 %v533
    %1529 = vmatmul.bf16.gmra.mxu0 %v1519
    %v1530 = vpop.f32.mrf.mxu0
    %v1531 = vadd.f32 0.0, %v1530
    %v1532 = vpop.f32.mrf.mxu0
    %1533 = vdwg.mxu0
    %v1534 = vadd.f32 %v1471, %v1531
    %v1535 = vadd.f32 %v1534, %v393
    %v1536 = vxor.u32 %v1535, 2147483648
    %v1537 = vmul.f32 %v1536, 1.442695
    %v1538 = vpow.pop %v1537
    %v1539 = vadd.f32 %v1538, 1.0
    %v1540 = vrcp.pop %v1539
    %v1541 = vmul.f32 %v1539, %v1540
    %v1542 = vsub.f32 1.0, %v1541
    %v1543 = vmul.f32 %v1540, %v1542
    %v1544 = vadd.f32 %v1540, %v1543
    %vm1545 = vweird.f32 %v1539
    %vm1546 = vweird.f32 %v1540
    %vm1547 = vmor %vm1545, %vm1546
    %v1548 = vsel %vm1547, %v1540, %v1544
    %v1549 = vand.u32 2147483647, %v1539
    %vm1550 = vcmp.eq.f32.partialorder %v1549, 8.507059e+37
    %v1551 = vand.u32 %v1539, 2147483648
    %v1552 = vor.u32 1.1754944e-38, %v1551
    %v1553 = vsel %vm1550, %v1552, %v1548
    %v1554 = vmul.f32 1.0, %v1553
    %v1555 = vtanh.pop %v1535
    %v1556 = vmul.f32 %v1554, %v1428
    %1558 = vrot.lane.b32.xlu0 %v1555, 32
    %v1559 = vpop.permute.xlu0 %1558
    %v1561 = vmul.f32 %v1554, %v1559
    %1563 = vrot.lane.b32.xlu0 %v1561, 32
    %v1564 = vpop.permute.xlu0 %1563
    %v1566 = vadd.f32 %v1556, %v1564
    %v1567 = vtanh.pop %v1566
    %1569 = vrot.lane.b32.xlu0 %v1567, 32
    %v1570 = vpop.permute.xlu0 %1569
    %v1572 = vmul.f32 %v1554, %v1570
    %1573 = vrot.lane.b32.xlu0 %v1158, 64
    %v1574 = vpop.permute.xlu0 %1573
    %1577 = vrot.lane.b32.xlu0 %v1572, 32
    %v1578 = vpop.permute.xlu0 %1577
    %v1580 = vsel %vm405, %v1574, %v1303
    %v1581 = vsel %vm448, %v1580, %v1434
    %v1582 = vsel %vm1019, %v1581, %v1578
    %s1583 = scalar_lea.vmem [#allocation12], 8
    %1584 = vst [vmem:[%s1583] sm:$0xff] %v1582
    %1586 = vrot.lane.b32.xlu0 %v1513, 64
    %v1587 = vpop.permute.xlu0 %1586
    %1589 = vst.msk [vmem:[#allocation13] sm:$0xff] %vm405, %v1587
    %1591 = vrot.lane.b32.xlu0 %v1507, 96
    %v1592 = vpop.permute.xlu0 %1591
    %1594 = vst.msk [vmem:[#allocation15] sm:$0xff] %vm405, %v1592
    %1595 = vrot.lane.b32.xlu0 %v1572, 64
    %v1596 = vpop.permute.xlu0 %1595
    %1598 = vst.msk [vmem:[%s396] sm:$0xff] %vm405, %v1596
    %1600 = vrot.lane.b32.xlu0 %v1566, 96
    %v1601 = vpop.permute.xlu0 %1600
    %1603 = vst.msk [vmem:[%s399] sm:$0xff] %vm405, %v1601
    // Predicated region
    $region70: #{tpu_custom_call.1} parent=1 // pred_check
      _
    $region71: #{tpu_custom_call.1} parent=1 // pred_check_branch
      %1605 = sbr.rel (0) target = $region73
    $region72: #{tpu_custom_call.1} parent=1 // pred_region
      %s1606 = sadd.s32 0, 0
      %s1607 = smul.u32 2, %s1606
      %1609 = vsyncadd [#allocation5], 0
      %s1610 = smul.addr %s1607, 8
      %s1611 = scalar_lea.hbm %s11, %s1610
      %s1612 = sshll.u32 [#allocation12], 4
      %s1613 = int_to_ptr.vmem [resolvable:$true] %s1612
      %s1614 = sshll.u32 %s1611, 4
      %s1615 = int_to_ptr.hbm [resolvable:$true] %s1614
      %1620 = dma.vmem_to_hbm [thread:$0]  %s1613, 256, %s1615, [#allocation5], 128, 128, 8
    $region73: #{tpu_custom_call.1} parent=1 // pred_fallthru
      _
    // Predicated region
    $region74: #{tpu_custom_call.1} parent=1 // pred_check
      _
    $region75: #{tpu_custom_call.1} parent=1 // pred_check_branch
      %1622 = sbr.rel (0) target = $region77
    $region76: #{tpu_custom_call.1} parent=1 // pred_region
      %1624 = vsyncadd [#allocation14], 0
      %s1625 = sshll.u32 [#allocation13], 4
      %s1626 = int_to_ptr.vmem [resolvable:$true] %s1625
      %s1627 = sshll.u32 %s12, 4
      %s1628 = int_to_ptr.hbm [resolvable:$true] %s1627
      %1633 = dma.vmem_to_hbm [thread:$0]  %s1626, 256, %s1628, [#allocation14], 128, 128, 8
    $region77: #{tpu_custom_call.1} parent=1 // pred_fallthru
      _
    // Predicated region
    $region78: #{tpu_custom_call.1} parent=1 // pred_check
      _
    $region79: #{tpu_custom_call.1} parent=1 // pred_check_branch
      %1635 = sbr.rel (0) target = $region81
    $region80: #{tpu_custom_call.1} parent=1 // pred_region
      %1637 = vsyncadd [#allocation14], 0
      %s1638 = sshll.u32 [#allocation15], 4
      %s1639 = int_to_ptr.vmem [resolvable:$true] %s1638
      %s1640 = sshll.u32 %s13, 4
      %s1641 = int_to_ptr.hbm [resolvable:$true] %s1640
      %1646 = dma.vmem_to_hbm [thread:$0]  %s1639, 256, %s1641, [#allocation14], 128, 128, 8
    $region81: #{tpu_custom_call.1} parent=1 // pred_fallthru
      _
    // Predicated region
    $region82: #{tpu_custom_call.1} parent=1 // pred_check
      _
    $region83: #{tpu_custom_call.1} parent=1 // pred_check_branch
      %1648 = sbr.rel (0) target = $region85
    $region84: #{tpu_custom_call.1} parent=1 // pred_region
      %1650 = dma.done [#allocation5], 256
    $region85: #{tpu_custom_call.1} parent=1 // pred_fallthru
      _
    // Predicated region
    $region86: #{tpu_custom_call.1} parent=1 // pred_check
      _
    $region87: #{tpu_custom_call.1} parent=1 // pred_check_branch
      %1652 = sbr.rel (0) target = $region89
    $region88: #{tpu_custom_call.1} parent=1 // pred_region
      %1654 = dma.done [#allocation14], 256
    $region89: #{tpu_custom_call.1} parent=1 // pred_fallthru
      _
    // Predicated region
    $region90: #{tpu_custom_call.1} parent=1 // pred_check
      _
    $region91: #{tpu_custom_call.1} parent=1 // pred_check_branch
      %1656 = sbr.rel (0) target = $region93
    $region92: #{tpu_custom_call.1} parent=1 // pred_region
      %1658 = dma.done [#allocation14], 256
    $region93: #{tpu_custom_call.1} parent=1 // pred_fallthru
      _
    %1659 = vsyncpa [#allocation4], 1
    %1660 = vsyncpa [#allocation7], 1
    %1661 = vsyncpa [#allocation10], 1
    %1662 = vsyncpa [#allocation5], 1
    %1663 = vsyncpa [#allocation14], 1

</llo_original>
